<compile_context>
chip_gen: v6e
topology: v6e:2x2x1
jax: 0.10.0
libtpu: 0.0.40
codegen_flags: <defaults>
</compile_context>

<pallas_src>
import functools

import jax
import jax.numpy as jnp
from jax.experimental import pallas as pl
from jax.experimental.pallas import tpu as pltpu

_PO = 8  # sublane offset of the real data inside the padded-width scratch


def _bottleneck_kernel(*refs, TH, W, Cin, E, Cout, do_expand, residual,
                       mxu_dtype):
    """One (batch, H-strip) tile per invocation.

    refs (do_expand=True):
      x, xt, xb, we, be, wd, bd, wp, bp, out, zpad
    refs (do_expand=False):
      x, xt, xb, wd, bd, wp, bp, out, zpad

    x    : (1, TH, W, Cin)   input strip (rows [h0, h0+TH))
    xt   : (1, 1,  W, Cin)   row h0-1 (clamped fetch; zeroed at image top)
    xb   : (1, 1,  W, Cin)   row h0+TH (clamped fetch; zeroed at image bottom)
    we   : (Cin, E)  bf16    1x1 expand weights, BN1 scale folded in
    be   : (1, E)    f32     folded BN1 bias
    wd   : (3, 3, E) f32     depthwise weights, BN2 scale folded in
    bd   : (1, E)    f32     folded BN2 bias
    wp   : (E, Cout) bf16    1x1 project weights, BN3 scale folded in
    bp   : (1, Cout) f32     folded BN3 bias
    out  : (1, TH, W, Cout)  output strip
    zpad : (TH+2, W+16, E)   VMEM scratch; data at columns [8, 8+W)
    """
    if do_expand:
        (x_ref, xt_ref, xb_ref, we_ref, be_ref, wd_ref, bd_ref,
         wp_ref, bp_ref, o_ref, zpad_ref) = refs
    else:
        (x_ref, xt_ref, xb_ref, wd_ref, bd_ref,
         wp_ref, bp_ref, o_ref, zpad_ref) = refs
        we_ref = be_ref = None

    hs = pl.program_id(1)
    n_hs = pl.num_programs(1)

    def expand(rows):                       # (R, W, Cin) -> (R, W, E) f32
        if not do_expand:                   # expansion == 1: conv1 is skipped
            return rows.astype(jnp.float32)
        r = rows.shape[0]
        y = jnp.dot(rows.reshape(r * W, Cin).astype(mxu_dtype),
                    we_ref[...],
                    preferred_element_type=jnp.float32)
        y = jnp.clip(y + be_ref[0], 0.0, 6.0)
        return y.reshape(r, W, E)

    # ---- zero only the pad-column bands the shifted taps actually read -----
    zpad_ref[:, 0:_PO, :] = jnp.zeros((TH + 2, _PO, E), jnp.float32)
    zpad_ref[:, _PO + W:_PO + W + 8, :] = jnp.zeros((TH + 2, 8, E), jnp.float32)

    # ---- expanded activation for the strip (aligned writes at offset 8) ----
    x = x_ref[0]                                             # (TH, W, Cin)
    zpad_ref[1:TH + 1, _PO:_PO + W, :] = expand(x)

    # ---- halo rows: expanded (interior strips) or zero (image border) ------
    @pl.when(hs > 0)
    def _():
        zpad_ref[0:1, _PO:_PO + W, :] = expand(xt_ref[0])

    @pl.when(hs == 0)
    def _():
        zpad_ref[0:1, _PO:_PO + W, :] = jnp.zeros((1, W, E), jnp.float32)

    @pl.when(hs < n_hs - 1)
    def _():
        zpad_ref[TH + 1:TH + 2, _PO:_PO + W, :] = expand(xb_ref[0])

    @pl.when(hs == n_hs - 1)
    def _():
        zpad_ref[TH + 1:TH + 2, _PO:_PO + W, :] = jnp.zeros((1, W, E),
                                                            jnp.float32)

    # ---- 3x3 depthwise conv (stride 1): column shifts hoisted out of the ---
    # ---- dy loop (2 shifted copies total), row shifts are free dim-0 slices
    wd = wd_ref[...]                                         # (3, 3, E) f32
    zl = zpad_ref[:, _PO - 1:_PO - 1 + W, :]                 # left-tap cols
    zc = zpad_ref[:, _PO:_PO + W, :]                         # center (aligned)
    zr = zpad_ref[:, _PO + 1:_PO + 1 + W, :]                 # right-tap cols

    acc = jnp.zeros((TH, W, E), jnp.float32)
    for dy in range(3):
        acc = (acc
               + zl[dy:dy + TH] * wd[dy, 0]
               + zc[dy:dy + TH] * wd[dy, 1]
               + zr[dy:dy + TH] * wd[dy, 2])
    acc = jnp.clip(acc + bd_ref[0], 0.0, 6.0)

    # ---- 1x1 projection (+ folded BN3) (+ residual on un-expanded input) ---
    proj = jnp.dot(acc.reshape(TH * W, E).astype(mxu_dtype), wp_ref[...],
                   preferred_element_type=jnp.float32)
    proj = (proj + bp_ref[0]).reshape(TH, W, Cout)
    if residual:
        proj = proj + x.astype(jnp.float32)
    o_ref[0] = proj.astype(o_ref.dtype)


def _fold_bn(gamma, beta, mean, var, eps):
    scale = gamma / jnp.sqrt(var + eps)
    bias = beta - mean * scale
    return scale, bias


def _pick_strip(H, target):
    # Largest divisor of H that is <= target.  (Prime H degrades to TH=1 —
    # correct but slow; pad H at the model boundary if that matters.)
    th = min(target, H)
    while H % th:
        th -= 1
    return th


def bottleneck_stride_one(x_nhwc, params, *, expansion, eps=1e-5,
                          strip_rows=None):
    """Fused BottleNeck_strideOne.

    x_nhwc : (B, H, W, Cin) activations, channels last.  (The PyTorch module
             is NCHW; do the layout conversion once at the model boundary.)
    params : PyTorch-layout parameters:
        'w1'  (E, Cin, 1, 1)  expand conv weight (used only if expansion != 1)
        'bn1' (gamma, beta, running_mean, running_var), each (E,)
        'wd'  (E, 1, 3, 3)    depthwise conv weight
        'bn2' (gamma, beta, running_mean, running_var), each (E,)
        'wp'  (Cout, E, 1, 1) project conv weight
        'bn3' (gamma, beta, running_mean, running_var), each (Cout,)
    """
    B, H, W, Cin = x_nhwc.shape
    do_expand = expansion != 1
    E = expansion * Cin
    Cout = params['wp'].shape[0]
    residual = (Cin == Cout)
    mxu_dtype = jnp.bfloat16

    # ---- fold BatchNorm (inference) into conv weights / per-channel biases -
    we = be = None
    if do_expand:
        s1, b1 = _fold_bn(*params['bn1'], eps)
        we = (params['w1'][:, :, 0, 0].T * s1[None, :]).astype(mxu_dtype)
        be = b1.reshape(1, E).astype(jnp.float32)

    s2, b2 = _fold_bn(*params['bn2'], eps)
    wd = (jnp.transpose(params['wd'][:, 0, :, :], (1, 2, 0))
          * s2[None, None, :]).astype(jnp.float32)           # (3,3,E) f32 (VPU)
    bd = b2.reshape(1, E).astype(jnp.float32)

    s3, b3 = _fold_bn(*params['bn3'], eps)
    wp = (params['wp'][:, :, 0, 0].T * s3[None, :]).astype(mxu_dtype)  # (E,Cout)
    bp = b3.reshape(1, Cout).astype(jnp.float32)

    # ---- tiling -------------------------------------------------------------
    if strip_rows is None:
        target = max(8, -(-1024 // W))                        # TH*W >= ~1024
        scratch_cap = max(1, (6 * 2**20) // ((W + 16) * E * 4) - 2)
        strip_rows = max(1, min(target, scratch_cap, H))
    TH = _pick_strip(H, strip_rows)
    n_hs = H // TH

    # ---- explicit VMEM budget (double-buffered I/O + weights + scratch) ----
    itemsize = jnp.dtype(x_nhwc.dtype).itemsize
    w_bytes = (wd.size + bd.size + bp.size) * 4 + wp.size * 2
    if do_expand:
        w_bytes += we.size * 2 + be.size * 4
    io_bytes = 2 * ((TH * W * Cin + 2 * W * Cin) * itemsize
                    + TH * W * Cout * itemsize)
    scratch_bytes = (TH + 2) * (W + 16) * E * 4
    vmem_limit = int(min(64 * 2**20,
                         max(16 * 2**20,
                             2 * w_bytes + io_bytes + scratch_bytes
                             + 8 * 2**20)))

    kernel = functools.partial(
        _bottleneck_kernel, TH=TH, W=W, Cin=Cin, E=E, Cout=Cout,
        do_expand=do_expand, residual=residual, mxu_dtype=mxu_dtype)

    in_specs = [
        # main strip: rows [hs*TH, hs*TH + TH)
        pl.BlockSpec((1, TH, W, Cin), lambda b, hs: (b, hs, 0, 0)),
        # top halo row hs*TH - 1 (clamped; zeroed in-kernel at hs == 0)
        pl.BlockSpec((1, 1, W, Cin),
                     lambda b, hs: (b, jnp.maximum(hs * TH - 1, 0), 0, 0)),
        # bottom halo row hs*TH + TH (clamped; zeroed at the last strip)
        pl.BlockSpec((1, 1, W, Cin),
                     lambda b, hs: (b, jnp.minimum((hs + 1) * TH, H - 1), 0, 0)),
    ]
    operands = [x_nhwc, x_nhwc, x_nhwc]
    if do_expand:
        in_specs += [pl.BlockSpec((Cin, E), lambda b, hs: (0, 0)),
                     pl.BlockSpec((1, E), lambda b, hs: (0, 0))]
        operands += [we, be]
    in_specs += [pl.BlockSpec((3, 3, E), lambda b, hs: (0, 0, 0)),
                 pl.BlockSpec((1, E), lambda b, hs: (0, 0)),
                 pl.BlockSpec((E, Cout), lambda b, hs: (0, 0)),
                 pl.BlockSpec((1, Cout), lambda b, hs: (0, 0))]
    operands += [wd, bd, wp, bp]

    out = pl.pallas_call(
        kernel,
        out_shape=jax.ShapeDtypeStruct((B, H, W, Cout), x_nhwc.dtype),
        grid_spec=pltpu.PrefetchScalarGridSpec(
            num_scalar_prefetch=0,
            grid=(B, n_hs),
            in_specs=in_specs,
            out_specs=pl.BlockSpec((1, TH, W, Cout), lambda b, hs: (b, hs, 0, 0)),
            scratch_shapes=[pltpu.VMEM((TH + 2, W + 16, E), jnp.float32)],
        ),
        compiler_params=pltpu.CompilerParams(
            dimension_semantics=("parallel", "parallel"),
            vmem_limit_bytes=vmem_limit),
    )(*operands)

    return out


# --------------------------- pure-JAX reference -----------------------------
def _reference(x_nhwc, params, *, expansion, eps=1e-5):
    hi = jax.lax.Precision.HIGHEST

    def bn(y, p):
        g, b, m, v = p
        return (y - m) * (g / jnp.sqrt(v + eps)) + b

    Cin = x_nhwc.shape[-1]
    z = x_nhwc
    if expansion != 1:
        w1 = jnp.transpose(params['w1'], (2, 3, 1, 0))              # (1,1,Cin,E)
        z = jax.lax.conv_general_dilated(
            z, w1, (1, 1), ((0, 0), (0, 0)),
            dimension_numbers=("NHWC", "HWIO", "NHWC"), precision=hi)
        z = jnp.clip(bn(z, params['bn1']), 0.0, 6.0)
    E = z.shape[-1]
    wd = jnp.transpose(params['wd'], (2, 3, 1, 0))                  # (3,3,1,E)
    z = jax.lax.conv_general_dilated(
        z, wd, (1, 1), ((1, 1), (1, 1)),
        dimension_numbers=("NHWC", "HWIO", "NHWC"),
        feature_group_count=E, precision=hi)
    z = jnp.clip(bn(z, params['bn2']), 0.0, 6.0)
    wp = jnp.transpose(params['wp'], (2, 3, 1, 0))                  # (1,1,E,Cout)
    z = jax.lax.conv_general_dilated(
        z, wp, (1, 1), ((0, 0), (0, 0)),
        dimension_numbers=("NHWC", "HWIO", "NHWC"), precision=hi)
    z = bn(z, params['bn3'])
    if params['wp'].shape[0] == Cin:
        z = x_nhwc + z
    return z


def _make_params(key, Cin, Cout, expansion):
    E = expansion * Cin
    ks = jax.random.split(key, 6)

    def bn_params(k, C):
        k1, k2, k3, k4 = jax.random.split(k, 4)
        return (1.0 + 0.1 * jax.random.normal(k1, (C,), jnp.float32),   # gamma
                0.1 * jax.random.normal(k2, (C,), jnp.float32),         # beta
                0.1 * jax.random.normal(k3, (C,), jnp.float32),         # mean
                1.0 + 0.1 * jax.random.uniform(k4, (C,), jnp.float32))  # var

    return {
        'w1': 0.2 * jax.random.normal(ks[0], (E, Cin, 1, 1), jnp.float32),
        'bn1': bn_params(ks[1], E),
        'wd': 0.2 * jax.random.normal(ks[2], (E, 1, 3, 3), jnp.float32),
        'bn2': bn_params(ks[3], E),
        'wp': 0.2 * jax.random.normal(ks[4], (Cout, E, 1, 1), jnp.float32),
        'bn3': bn_params(ks[5], Cout),
    }


if __name__ == "__main__":
    key = jax.random.PRNGKey(0)
    k1, k2, k3, k4 = jax.random.split(key, 4)

    # Tolerance reflects bf16 MXU operands in the fused kernel vs an f32
    # HIGHEST-precision reference.
    TOL = 1e-1

    # Case 1: expansion=6, in_fts == out_fts -> expand path + residual add,
    # two H-strips (exercises the halo / border handling under pl.when).
    B, Cin, Cout, H, W, expansion = 2, 4, 4, 16, 16, 6
    x = jax.random.normal(k1, (B, H, W, Cin), jnp.float32)
    params = _make_params(k2, Cin, Cout, expansion)
    out = jax.block_until_ready(
        bottleneck_stride_one(x, params, expansion=expansion, strip_rows=8))
    ref = _reference(x, params, expansion=expansion)
    assert out.shape == ref.shape
    err = float(jnp.max(jnp.abs(out - ref)))
    assert err < TOL, f"case1 mismatch vs JAX reference: {err}"

    # Case 2: expansion=1 (conv1 skipped, no expand weights shipped),
    # in_fts != out_fts -> no residual, single strip (both halo rows zeroed).
    B, Cin, Cout, H, W, expansion = 2, 8, 16, 8, 8, 1
    x = jax.random.normal(k3, (B, H, W, Cin), jnp.float32)
    params = _make_params(k4, Cin, Cout, expansion)
    out = jax.block_until_ready(
        bottleneck_stride_one(x, params, expansion=expansion))
    ref = _reference(x, params, expansion=expansion)
    assert out.shape == ref.shape
    err = float(jnp.max(jnp.abs(out - ref)))
    assert err < TOL, f"case2 mismatch vs JAX reference: {err}"

    print("KERNEL_OK")
</pallas_src>

<mosaic_0001>
module attributes {stable_mosaic.version = 11 : i64} {
  func.func @_bottleneck_kernel(%arg0: i32, %arg1: i32, %arg2: memref<1x8x16x4xf32, #tpu.memory_space<vmem>>, %arg3: memref<1x1x16x4xf32, #tpu.memory_space<vmem>>, %arg4: memref<1x1x16x4xf32, #tpu.memory_space<vmem>>, %arg5: memref<4x24xbf16, #tpu.memory_space<vmem>>, %arg6: memref<1x24xf32, #tpu.memory_space<vmem>>, %arg7: memref<3x3x24xf32, #tpu.memory_space<vmem>>, %arg8: memref<1x24xf32, #tpu.memory_space<vmem>>, %arg9: memref<24x4xbf16, #tpu.memory_space<vmem>>, %arg10: memref<1x4xf32, #tpu.memory_space<vmem>>, %arg11: memref<1x8x16x4xf32, #tpu.memory_space<vmem>>, %arg12: memref<10x32x24xf32, #tpu.memory_space<vmem>>) attributes {dimension_semantics = [#tpu.dimension_semantics<parallel>, #tpu.dimension_semantics<parallel>], iteration_bounds = array<i64: 2, 2>, scalar_prefetch = 0 : i64, scratch_operands = 1 : i64, tpu.core_type = #tpu.core_type<tc>, window_params = [{transform_indices = @transform_0, window_bounds = array<i64: 1, 8, 16, 4>}, {transform_indices = @transform_1, window_bounds = array<i64: 1, 1, 16, 4>}, {transform_indices = @transform_2, window_bounds = array<i64: 1, 1, 16, 4>}, {pipeline_mode = #tpu.pipeline_mode<synchronous>, transform_indices = @transform_3, window_bounds = array<i64: 4, 24>}, {pipeline_mode = #tpu.pipeline_mode<synchronous>, transform_indices = @transform_4, window_bounds = array<i64: 1, 24>}, {pipeline_mode = #tpu.pipeline_mode<synchronous>, transform_indices = @transform_5, window_bounds = array<i64: 3, 3, 24>}, {pipeline_mode = #tpu.pipeline_mode<synchronous>, transform_indices = @transform_6, window_bounds = array<i64: 1, 24>}, {pipeline_mode = #tpu.pipeline_mode<synchronous>, transform_indices = @transform_7, window_bounds = array<i64: 24, 4>}, {pipeline_mode = #tpu.pipeline_mode<synchronous>, transform_indices = @transform_8, window_bounds = array<i64: 1, 4>}, {transform_indices = @transform_9, window_bounds = array<i64: 1, 8, 16, 4>}]} {
    %cst = arith.constant 0.000000e+00 : f32
    %0 = vector.broadcast %cst : f32 to vector<10x8x24xf32>
    %c0 = arith.constant 0 : index
    %c0_0 = arith.constant 0 : index
    %c0_1 = arith.constant 0 : index
    %1 = vector.load %arg12[%c0, %c0_0, %c0_1] : memref<10x32x24xf32, #tpu.memory_space<vmem>>, vector<10x8x24xf32>
    tpu.vector_store %arg12[%c0, %c0_0, %c0_1], %0 {strides = array<i32>} : memref<10x32x24xf32, #tpu.memory_space<vmem>>, vector<10x8x24xf32>,
    %cst_2 = arith.constant 0.000000e+00 : f32
    %2 = vector.broadcast %cst_2 : f32 to vector<10x8x24xf32>
    %c0_3 = arith.constant 0 : index
    %c24 = arith.constant 24 : index
    %c0_4 = arith.constant 0 : index
    %3 = vector.load %arg12[%c0_3, %c24, %c0_4] : memref<10x32x24xf32, #tpu.memory_space<vmem>>, vector<10x8x24xf32>
    tpu.vector_store %arg12[%c0_3, %c24, %c0_4], %2 {strides = array<i32>} : memref<10x32x24xf32, #tpu.memory_space<vmem>>, vector<10x8x24xf32>,
    %c0_5 = arith.constant 0 : index
    %c0_6 = arith.constant 0 : index
    %c0_7 = arith.constant 0 : index
    %c0_8 = arith.constant 0 : index
    %4 = vector.load %arg2[%c0_5, %c0_6, %c0_7, %c0_8] : memref<1x8x16x4xf32, #tpu.memory_space<vmem>>, vector<1x8x16x4xf32>
    %5 = vector.shape_cast %4 : vector<1x8x16x4xf32> to vector<8x16x4xf32>
    %6 = vector.shape_cast %5 : vector<8x16x4xf32> to vector<128x4xf32>
    %7 = arith.truncf %6 : vector<128x4xf32> to vector<128x4xbf16>
    %c0_9 = arith.constant 0 : index
    %c0_10 = arith.constant 0 : index
    %8 = vector.load %arg5[%c0_9, %c0_10] : memref<4x24xbf16, #tpu.memory_space<vmem>>, vector<4x24xbf16>
    %cst_11 = arith.constant dense<0.000000e+00> : vector<128x24xf32>
    %9 = tpu.matmul %7, %8, %cst_11 {dimension_numbers = #tpu.dot_dimension_numbers<[1], [0], [0], [1], [0, 0, 1, 1], [], []>} : vector<128x4xbf16>, vector<4x24xbf16>, vector<128x24xf32> -> vector<128x24xf32>
    %c0_12 = arith.constant 0 : index
    %c0_13 = arith.constant 0 : index
    %10 = vector.load %arg6[%c0_12, %c0_13] : memref<1x24xf32, #tpu.memory_space<vmem>>, vector<1x24xf32>
    %11 = vector.shape_cast %10 : vector<1x24xf32> to vector<24xf32>
    %12 = vector.shape_cast %11 : vector<24xf32> to vector<1x24xf32>
    %13 = vector.broadcast %12 : vector<1x24xf32> to vector<128x24xf32>
    %14 = arith.addf %9, %13 : vector<128x24xf32>
    %cst_14 = arith.constant 0.000000e+00 : f32
    %cst_15 = arith.constant 6.000000e+00 : f32
    %15 = vector.broadcast %cst_14 : f32 to vector<128x24xf32>
    %16 = arith.maximumf %15, %14 : vector<128x24xf32>
    %17 = vector.broadcast %cst_15 : f32 to vector<128x24xf32>
    %18 = arith.minimumf %17, %16 : vector<128x24xf32>
    %19 = vector.shape_cast %18 : vector<128x24xf32> to vector<8x16x24xf32>
    %c1 = arith.constant 1 : index
    %c8 = arith.constant 8 : index
    %c0_16 = arith.constant 0 : index
    %20 = vector.load %arg12[%c1, %c8, %c0_16] : memref<10x32x24xf32, #tpu.memory_space<vmem>>, vector<8x16x24xf32>
    tpu.vector_store %arg12[%c1, %c8, %c0_16], %19 {strides = array<i32>} : memref<10x32x24xf32, #tpu.memory_space<vmem>>, vector<8x16x24xf32>,
    %c0_i32 = arith.constant 0 : i32
    %21 = arith.cmpi sgt, %arg1, %c0_i32 : i32
    %22 = arith.extui %21 : i1 to i32
    %c0_i32_17 = arith.constant 0 : i32
    %23 = arith.cmpi ne, %22, %c0_i32_17 : i32
    scf.if %23 {
      %c0_47 = arith.constant 0 : index
      %c0_48 = arith.constant 0 : index
      %c0_49 = arith.constant 0 : index
      %c0_50 = arith.constant 0 : index
      %124 = vector.load %arg3[%c0_47, %c0_48, %c0_49, %c0_50] : memref<1x1x16x4xf32, #tpu.memory_space<vmem>>, vector<1x1x16x4xf32>
      %125 = vector.shape_cast %124 : vector<1x1x16x4xf32> to vector<1x16x4xf32>
      %126 = vector.shape_cast %125 : vector<1x16x4xf32> to vector<16x4xf32>
      %127 = arith.truncf %126 : vector<16x4xf32> to vector<16x4xbf16>
      %c0_51 = arith.constant 0 : index
      %c0_52 = arith.constant 0 : index
      %128 = vector.load %arg5[%c0_51, %c0_52] : memref<4x24xbf16, #tpu.memory_space<vmem>>, vector<4x24xbf16>
      %cst_53 = arith.constant dense<0.000000e+00> : vector<16x24xf32>
      %129 = tpu.matmul %127, %128, %cst_53 {dimension_numbers = #tpu.dot_dimension_numbers<[1], [0], [0], [1], [0, 0, 1, 1], [], []>} : vector<16x4xbf16>, vector<4x24xbf16>, vector<16x24xf32> -> vector<16x24xf32>
      %c0_54 = arith.constant 0 : index
      %c0_55 = arith.constant 0 : index
      %130 = vector.load %arg6[%c0_54, %c0_55] : memref<1x24xf32, #tpu.memory_space<vmem>>, vector<1x24xf32>
      %131 = vector.shape_cast %130 : vector<1x24xf32> to vector<24xf32>
      %132 = vector.shape_cast %131 : vector<24xf32> to vector<1x24xf32>
      %133 = vector.broadcast %132 : vector<1x24xf32> to vector<16x24xf32>
      %134 = arith.addf %129, %133 : vector<16x24xf32>
      %cst_56 = arith.constant 0.000000e+00 : f32
      %cst_57 = arith.constant 6.000000e+00 : f32
      %135 = vector.broadcast %cst_56 : f32 to vector<16x24xf32>
      %136 = arith.maximumf %135, %134 : vector<16x24xf32>
      %137 = vector.broadcast %cst_57 : f32 to vector<16x24xf32>
      %138 = arith.minimumf %137, %136 : vector<16x24xf32>
      %139 = vector.shape_cast %138 : vector<16x24xf32> to vector<1x16x24xf32>
      %c0_58 = arith.constant 0 : index
      %c8_59 = arith.constant 8 : index
      %c0_60 = arith.constant 0 : index
      %140 = vector.load %arg12[%c0_58, %c8_59, %c0_60] : memref<10x32x24xf32, #tpu.memory_space<vmem>>, vector<1x16x24xf32>
      tpu.vector_store %arg12[%c0_58, %c8_59, %c0_60], %139 {strides = array<i32>} : memref<10x32x24xf32, #tpu.memory_space<vmem>>, vector<1x16x24xf32>,
    } else {
    }
    %c0_i32_18 = arith.constant 0 : i32
    %24 = arith.cmpi eq, %arg1, %c0_i32_18 : i32
    %25 = arith.extui %24 : i1 to i32
    %c0_i32_19 = arith.constant 0 : i32
    %26 = arith.cmpi ne, %25, %c0_i32_19 : i32
    scf.if %26 {
      %cst_47 = arith.constant 0.000000e+00 : f32
      %124 = vector.broadcast %cst_47 : f32 to vector<1x16x24xf32>
      %c0_48 = arith.constant 0 : index
      %c8_49 = arith.constant 8 : index
      %c0_50 = arith.constant 0 : index
      %125 = vector.load %arg12[%c0_48, %c8_49, %c0_50] : memref<10x32x24xf32, #tpu.memory_space<vmem>>, vector<1x16x24xf32>
      tpu.vector_store %arg12[%c0_48, %c8_49, %c0_50], %124 {strides = array<i32>} : memref<10x32x24xf32, #tpu.memory_space<vmem>>, vector<1x16x24xf32>,
    } else {
    }
    %c1_i32 = arith.constant 1 : i32
    %27 = arith.cmpi slt, %arg1, %c1_i32 : i32
    %28 = arith.extui %27 : i1 to i32
    %c0_i32_20 = arith.constant 0 : i32
    %29 = arith.cmpi ne, %28, %c0_i32_20 : i32
    scf.if %29 {
      %c0_47 = arith.constant 0 : index
      %c0_48 = arith.constant 0 : index
      %c0_49 = arith.constant 0 : index
      %c0_50 = arith.constant 0 : index
      %124 = vector.load %arg4[%c0_47, %c0_48, %c0_49, %c0_50] : memref<1x1x16x4xf32, #tpu.memory_space<vmem>>, vector<1x1x16x4xf32>
      %125 = vector.shape_cast %124 : vector<1x1x16x4xf32> to vector<1x16x4xf32>
      %126 = vector.shape_cast %125 : vector<1x16x4xf32> to vector<16x4xf32>
      %127 = arith.truncf %126 : vector<16x4xf32> to vector<16x4xbf16>
      %c0_51 = arith.constant 0 : index
      %c0_52 = arith.constant 0 : index
      %128 = vector.load %arg5[%c0_51, %c0_52] : memref<4x24xbf16, #tpu.memory_space<vmem>>, vector<4x24xbf16>
      %cst_53 = arith.constant dense<0.000000e+00> : vector<16x24xf32>
      %129 = tpu.matmul %127, %128, %cst_53 {dimension_numbers = #tpu.dot_dimension_numbers<[1], [0], [0], [1], [0, 0, 1, 1], [], []>} : vector<16x4xbf16>, vector<4x24xbf16>, vector<16x24xf32> -> vector<16x24xf32>
      %c0_54 = arith.constant 0 : index
      %c0_55 = arith.constant 0 : index
      %130 = vector.load %arg6[%c0_54, %c0_55] : memref<1x24xf32, #tpu.memory_space<vmem>>, vector<1x24xf32>
      %131 = vector.shape_cast %130 : vector<1x24xf32> to vector<24xf32>
      %132 = vector.shape_cast %131 : vector<24xf32> to vector<1x24xf32>
      %133 = vector.broadcast %132 : vector<1x24xf32> to vector<16x24xf32>
      %134 = arith.addf %129, %133 : vector<16x24xf32>
      %cst_56 = arith.constant 0.000000e+00 : f32
      %cst_57 = arith.constant 6.000000e+00 : f32
      %135 = vector.broadcast %cst_56 : f32 to vector<16x24xf32>
      %136 = arith.maximumf %135, %134 : vector<16x24xf32>
      %137 = vector.broadcast %cst_57 : f32 to vector<16x24xf32>
      %138 = arith.minimumf %137, %136 : vector<16x24xf32>
      %139 = vector.shape_cast %138 : vector<16x24xf32> to vector<1x16x24xf32>
      %c9_58 = arith.constant 9 : index
      %c8_59 = arith.constant 8 : index
      %c0_60 = arith.constant 0 : index
      %140 = vector.load %arg12[%c9_58, %c8_59, %c0_60] : memref<10x32x24xf32, #tpu.memory_space<vmem>>, vector<1x16x24xf32>
      tpu.vector_store %arg12[%c9_58, %c8_59, %c0_60], %139 {strides = array<i32>} : memref<10x32x24xf32, #tpu.memory_space<vmem>>, vector<1x16x24xf32>,
    } else {
    }
    %c1_i32_21 = arith.constant 1 : i32
    %30 = arith.cmpi eq, %arg1, %c1_i32_21 : i32
    %31 = arith.extui %30 : i1 to i32
    %c0_i32_22 = arith.constant 0 : i32
    %32 = arith.cmpi ne, %31, %c0_i32_22 : i32
    scf.if %32 {
      %cst_47 = arith.constant 0.000000e+00 : f32
      %124 = vector.broadcast %cst_47 : f32 to vector<1x16x24xf32>
      %c9_48 = arith.constant 9 : index
      %c8_49 = arith.constant 8 : index
      %c0_50 = arith.constant 0 : index
      %125 = vector.load %arg12[%c9_48, %c8_49, %c0_50] : memref<10x32x24xf32, #tpu.memory_space<vmem>>, vector<1x16x24xf32>
      tpu.vector_store %arg12[%c9_48, %c8_49, %c0_50], %124 {strides = array<i32>} : memref<10x32x24xf32, #tpu.memory_space<vmem>>, vector<1x16x24xf32>,
    } else {
    }
    %c0_23 = arith.constant 0 : index
    %c0_24 = arith.constant 0 : index
    %c0_25 = arith.constant 0 : index
    %33 = vector.load %arg7[%c0_23, %c0_24, %c0_25] : memref<3x3x24xf32, #tpu.memory_space<vmem>>, vector<3x3x24xf32>
    %c0_26 = arith.constant 0 : index
    %c7 = arith.constant 7 : index
    %c0_27 = arith.constant 0 : index
    %34 = vector.load %arg12[%c0_26, %c7, %c0_27] : memref<10x32x24xf32, #tpu.memory_space<vmem>>, vector<10x16x24xf32>
    %c0_28 = arith.constant 0 : index
    %c8_29 = arith.constant 8 : index
    %c0_30 = arith.constant 0 : index
    %35 = vector.load %arg12[%c0_28, %c8_29, %c0_30] : memref<10x32x24xf32, #tpu.memory_space<vmem>>, vector<10x16x24xf32>
    %c0_31 = arith.constant 0 : index
    %c9 = arith.constant 9 : index
    %c0_32 = arith.constant 0 : index
    %36 = vector.load %arg12[%c0_31, %c9, %c0_32] : memref<10x32x24xf32, #tpu.memory_space<vmem>>, vector<10x16x24xf32>
    %cst_33 = arith.constant 0.000000e+00 : f32
    %37 = vector.broadcast %cst_33 : f32 to vector<8x16x24xf32>
    %38 = vector.extract_strided_slice %34 {offsets = [0, 0, 0], sizes = [8, 16, 24], strides = [1, 1, 1]} : vector<10x16x24xf32> to vector<8x16x24xf32>
    %39 = vector.extract_strided_slice %33 {offsets = [0, 0, 0], sizes = [1, 1, 24], strides = [1, 1, 1]} : vector<3x3x24xf32> to vector<1x1x24xf32>
    %40 = vector.shape_cast %39 : vector<1x1x24xf32> to vector<24xf32>
    %41 = vector.shape_cast %40 : vector<24xf32> to vector<1x1x24xf32>
    %42 = vector.broadcast %41 : vector<1x1x24xf32> to vector<8x16x24xf32>
    %43 = arith.mulf %38, %42 : vector<8x16x24xf32>
    %44 = arith.addf %37, %43 : vector<8x16x24xf32>
    %45 = vector.extract_strided_slice %35 {offsets = [0, 0, 0], sizes = [8, 16, 24], strides = [1, 1, 1]} : vector<10x16x24xf32> to vector<8x16x24xf32>
    %46 = vector.extract_strided_slice %33 {offsets = [0, 1, 0], sizes = [1, 1, 24], strides = [1, 1, 1]} : vector<3x3x24xf32> to vector<1x1x24xf32>
    %47 = vector.shape_cast %46 : vector<1x1x24xf32> to vector<24xf32>
    %48 = vector.shape_cast %47 : vector<24xf32> to vector<1x1x24xf32>
    %49 = vector.broadcast %48 : vector<1x1x24xf32> to vector<8x16x24xf32>
    %50 = arith.mulf %45, %49 : vector<8x16x24xf32>
    %51 = arith.addf %44, %50 : vector<8x16x24xf32>
    %52 = vector.extract_strided_slice %36 {offsets = [0, 0, 0], sizes = [8, 16, 24], strides = [1, 1, 1]} : vector<10x16x24xf32> to vector<8x16x24xf32>
    %53 = vector.extract_strided_slice %33 {offsets = [0, 2, 0], sizes = [1, 1, 24], strides = [1, 1, 1]} : vector<3x3x24xf32> to vector<1x1x24xf32>
    %54 = vector.shape_cast %53 : vector<1x1x24xf32> to vector<24xf32>
    %55 = vector.shape_cast %54 : vector<24xf32> to vector<1x1x24xf32>
    %56 = vector.broadcast %55 : vector<1x1x24xf32> to vector<8x16x24xf32>
    %57 = arith.mulf %52, %56 : vector<8x16x24xf32>
    %58 = arith.addf %51, %57 : vector<8x16x24xf32>
    %59 = vector.extract_strided_slice %34 {offsets = [1, 0, 0], sizes = [8, 16, 24], strides = [1, 1, 1]} : vector<10x16x24xf32> to vector<8x16x24xf32>
    %60 = vector.extract_strided_slice %33 {offsets = [1, 0, 0], sizes = [1, 1, 24], strides = [1, 1, 1]} : vector<3x3x24xf32> to vector<1x1x24xf32>
    %61 = vector.shape_cast %60 : vector<1x1x24xf32> to vector<24xf32>
    %62 = vector.shape_cast %61 : vector<24xf32> to vector<1x1x24xf32>
    %63 = vector.broadcast %62 : vector<1x1x24xf32> to vector<8x16x24xf32>
    %64 = arith.mulf %59, %63 : vector<8x16x24xf32>
    %65 = arith.addf %58, %64 : vector<8x16x24xf32>
    %66 = vector.extract_strided_slice %35 {offsets = [1, 0, 0], sizes = [8, 16, 24], strides = [1, 1, 1]} : vector<10x16x24xf32> to vector<8x16x24xf32>
    %67 = vector.extract_strided_slice %33 {offsets = [1, 1, 0], sizes = [1, 1, 24], strides = [1, 1, 1]} : vector<3x3x24xf32> to vector<1x1x24xf32>
    %68 = vector.shape_cast %67 : vector<1x1x24xf32> to vector<24xf32>
    %69 = vector.shape_cast %68 : vector<24xf32> to vector<1x1x24xf32>
    %70 = vector.broadcast %69 : vector<1x1x24xf32> to vector<8x16x24xf32>
    %71 = arith.mulf %66, %70 : vector<8x16x24xf32>
    %72 = arith.addf %65, %71 : vector<8x16x24xf32>
    %73 = vector.extract_strided_slice %36 {offsets = [1, 0, 0], sizes = [8, 16, 24], strides = [1, 1, 1]} : vector<10x16x24xf32> to vector<8x16x24xf32>
    %74 = vector.extract_strided_slice %33 {offsets = [1, 2, 0], sizes = [1, 1, 24], strides = [1, 1, 1]} : vector<3x3x24xf32> to vector<1x1x24xf32>
    %75 = vector.shape_cast %74 : vector<1x1x24xf32> to vector<24xf32>
    %76 = vector.shape_cast %75 : vector<24xf32> to vector<1x1x24xf32>
    %77 = vector.broadcast %76 : vector<1x1x24xf32> to vector<8x16x24xf32>
    %78 = arith.mulf %73, %77 : vector<8x16x24xf32>
    %79 = arith.addf %72, %78 : vector<8x16x24xf32>
    %80 = vector.extract_strided_slice %34 {offsets = [2, 0, 0], sizes = [8, 16, 24], strides = [1, 1, 1]} : vector<10x16x24xf32> to vector<8x16x24xf32>
    %81 = vector.extract_strided_slice %33 {offsets = [2, 0, 0], sizes = [1, 1, 24], strides = [1, 1, 1]} : vector<3x3x24xf32> to vector<1x1x24xf32>
    %82 = vector.shape_cast %81 : vector<1x1x24xf32> to vector<24xf32>
    %83 = vector.shape_cast %82 : vector<24xf32> to vector<1x1x24xf32>
    %84 = vector.broadcast %83 : vector<1x1x24xf32> to vector<8x16x24xf32>
    %85 = arith.mulf %80, %84 : vector<8x16x24xf32>
    %86 = arith.addf %79, %85 : vector<8x16x24xf32>
    %87 = vector.extract_strided_slice %35 {offsets = [2, 0, 0], sizes = [8, 16, 24], strides = [1, 1, 1]} : vector<10x16x24xf32> to vector<8x16x24xf32>
    %88 = vector.extract_strided_slice %33 {offsets = [2, 1, 0], sizes = [1, 1, 24], strides = [1, 1, 1]} : vector<3x3x24xf32> to vector<1x1x24xf32>
    %89 = vector.shape_cast %88 : vector<1x1x24xf32> to vector<24xf32>
    %90 = vector.shape_cast %89 : vector<24xf32> to vector<1x1x24xf32>
    %91 = vector.broadcast %90 : vector<1x1x24xf32> to vector<8x16x24xf32>
    %92 = arith.mulf %87, %91 : vector<8x16x24xf32>
    %93 = arith.addf %86, %92 : vector<8x16x24xf32>
    %94 = vector.extract_strided_slice %36 {offsets = [2, 0, 0], sizes = [8, 16, 24], strides = [1, 1, 1]} : vector<10x16x24xf32> to vector<8x16x24xf32>
    %95 = vector.extract_strided_slice %33 {offsets = [2, 2, 0], sizes = [1, 1, 24], strides = [1, 1, 1]} : vector<3x3x24xf32> to vector<1x1x24xf32>
    %96 = vector.shape_cast %95 : vector<1x1x24xf32> to vector<24xf32>
    %97 = vector.shape_cast %96 : vector<24xf32> to vector<1x1x24xf32>
    %98 = vector.broadcast %97 : vector<1x1x24xf32> to vector<8x16x24xf32>
    %99 = arith.mulf %94, %98 : vector<8x16x24xf32>
    %100 = arith.addf %93, %99 : vector<8x16x24xf32>
    %c0_34 = arith.constant 0 : index
    %c0_35 = arith.constant 0 : index
    %101 = vector.load %arg8[%c0_34, %c0_35] : memref<1x24xf32, #tpu.memory_space<vmem>>, vector<1x24xf32>
    %102 = vector.shape_cast %101 : vector<1x24xf32> to vector<24xf32>
    %103 = vector.shape_cast %102 : vector<24xf32> to vector<1x1x24xf32>
    %104 = vector.broadcast %103 : vector<1x1x24xf32> to vector<8x16x24xf32>
    %105 = arith.addf %100, %104 : vector<8x16x24xf32>
    %cst_36 = arith.constant 0.000000e+00 : f32
    %cst_37 = arith.constant 6.000000e+00 : f32
    %106 = vector.broadcast %cst_36 : f32 to vector<8x16x24xf32>
    %107 = arith.maximumf %106, %105 : vector<8x16x24xf32>
    %108 = vector.broadcast %cst_37 : f32 to vector<8x16x24xf32>
    %109 = arith.minimumf %108, %107 : vector<8x16x24xf32>
    %110 = vector.shape_cast %109 : vector<8x16x24xf32> to vector<128x24xf32>
    %111 = arith.truncf %110 : vector<128x24xf32> to vector<128x24xbf16>
    %c0_38 = arith.constant 0 : index
    %c0_39 = arith.constant 0 : index
    %112 = vector.load %arg9[%c0_38, %c0_39] : memref<24x4xbf16, #tpu.memory_space<vmem>>, vector<24x4xbf16>
    %cst_40 = arith.constant dense<0.000000e+00> : vector<128x4xf32>
    %113 = tpu.matmul %111, %112, %cst_40 {dimension_numbers = #tpu.dot_dimension_numbers<[1], [0], [0], [1], [0, 0, 1, 1], [], []>} : vector<128x24xbf16>, vector<24x4xbf16>, vector<128x4xf32> -> vector<128x4xf32>
    %c0_41 = arith.constant 0 : index
    %c0_42 = arith.constant 0 : index
    %114 = vector.load %arg10[%c0_41, %c0_42] : memref<1x4xf32, #tpu.memory_space<vmem>>, vector<1x4xf32>
    %115 = vector.shape_cast %114 : vector<1x4xf32> to vector<4xf32>
    %116 = vector.shape_cast %115 : vector<4xf32> to vector<1x4xf32>
    %117 = vector.broadcast %116 : vector<1x4xf32> to vector<128x4xf32>
    %118 = arith.addf %113, %117 : vector<128x4xf32>
    %119 = vector.shape_cast %118 : vector<128x4xf32> to vector<8x16x4xf32>
    %120 = arith.addf %119, %5 : vector<8x16x4xf32>
    %c0_43 = arith.constant 0 : index
    %c0_44 = arith.constant 0 : index
    %c0_45 = arith.constant 0 : index
    %c0_46 = arith.constant 0 : index
    %121 = vector.load %arg11[%c0_43, %c0_44, %c0_45, %c0_46] : memref<1x8x16x4xf32, #tpu.memory_space<vmem>>, vector<1x8x16x4xf32>
    %122 = vector.shape_cast %121 : vector<1x8x16x4xf32> to vector<8x16x4xf32>
    %123 = vector.shape_cast %120 : vector<8x16x4xf32> to vector<1x8x16x4xf32>
    tpu.vector_store %arg11[%c0_43, %c0_44, %c0_45, %c0_46], %123 {strides = array<i32>} : memref<1x8x16x4xf32, #tpu.memory_space<vmem>>, vector<1x8x16x4xf32>,
    return
  }
  func.func @transform_0(%arg0: i32, %arg1: i32) -> (i32, i32, i32, i32) {
    %c0_i32 = arith.constant 0 : i32
    %c0_i32_0 = arith.constant 0 : i32
    %c0_i32_1 = arith.constant 0 : i32
    return %arg0, %arg1, %c0_i32, %c0_i32_0 : i32, i32, i32, i32
  }
  func.func @transform_1(%arg0: i32, %arg1: i32) -> (i32, i32, i32, i32) {
    %c8_i32 = arith.constant 8 : i32
    %0 = arith.muli %arg1, %c8_i32 : i32
    %c1_i32 = arith.constant 1 : i32
    %1 = arith.subi %0, %c1_i32 : i32
    %c0_i32 = arith.constant 0 : i32
    %2 = arith.maxsi %1, %c0_i32 : i32
    %c0_i32_0 = arith.constant 0 : i32
    %c0_i32_1 = arith.constant 0 : i32
    %c0_i32_2 = arith.constant 0 : i32
    return %arg0, %2, %c0_i32_0, %c0_i32_1 : i32, i32, i32, i32
  }
  func.func @transform_2(%arg0: i32, %arg1: i32) -> (i32, i32, i32, i32) {
    %c1_i32 = arith.constant 1 : i32
    %0 = arith.addi %arg1, %c1_i32 : i32
    %c8_i32 = arith.constant 8 : i32
    %1 = arith.muli %0, %c8_i32 : i32
    %c15_i32 = arith.constant 15 : i32
    %2 = arith.minsi %1, %c15_i32 : i32
    %c0_i32 = arith.constant 0 : i32
    %c0_i32_0 = arith.constant 0 : i32
    %c0_i32_1 = arith.constant 0 : i32
    return %arg0, %2, %c0_i32, %c0_i32_0 : i32, i32, i32, i32
  }
  func.func @transform_3(%arg0: i32, %arg1: i32) -> (i32, i32) {
    %c0_i32 = arith.constant 0 : i32
    %c0_i32_0 = arith.constant 0 : i32
    %c0_i32_1 = arith.constant 0 : i32
    return %c0_i32, %c0_i32_0 : i32, i32
  }
  func.func @transform_4(%arg0: i32, %arg1: i32) -> (i32, i32) {
    %c0_i32 = arith.constant 0 : i32
    %c0_i32_0 = arith.constant 0 : i32
    %c0_i32_1 = arith.constant 0 : i32
    return %c0_i32, %c0_i32_0 : i32, i32
  }
  func.func @transform_5(%arg0: i32, %arg1: i32) -> (i32, i32, i32) {
    %c0_i32 = arith.constant 0 : i32
    %c0_i32_0 = arith.constant 0 : i32
    %c0_i32_1 = arith.constant 0 : i32
    %c0_i32_2 = arith.constant 0 : i32
    return %c0_i32, %c0_i32_0, %c0_i32_1 : i32, i32, i32
  }
  func.func @transform_6(%arg0: i32, %arg1: i32) -> (i32, i32) {
    %c0_i32 = arith.constant 0 : i32
    %c0_i32_0 = arith.constant 0 : i32
    %c0_i32_1 = arith.constant 0 : i32
    return %c0_i32, %c0_i32_0 : i32, i32
  }
  func.func @transform_7(%arg0: i32, %arg1: i32) -> (i32, i32) {
    %c0_i32 = arith.constant 0 : i32
    %c0_i32_0 = arith.constant 0 : i32
    %c0_i32_1 = arith.constant 0 : i32
    return %c0_i32, %c0_i32_0 : i32, i32
  }
  func.func @transform_8(%arg0: i32, %arg1: i32) -> (i32, i32) {
    %c0_i32 = arith.constant 0 : i32
    %c0_i32_0 = arith.constant 0 : i32
    %c0_i32_1 = arith.constant 0 : i32
    return %c0_i32, %c0_i32_0 : i32, i32
  }
  func.func @transform_9(%arg0: i32, %arg1: i32) -> (i32, i32, i32, i32) {
    %c0_i32 = arith.constant 0 : i32
    %c0_i32_0 = arith.constant 0 : i32
    %c0_i32_1 = arith.constant 0 : i32
    return %arg0, %arg1, %c0_i32, %c0_i32_0 : i32, i32, i32, i32
  }
}

</mosaic_0001>

<llo_original>
// kernel: tpu_custom_call.1
$region0: #{tpu_custom_call.1}
  #allocation0 [shape = 'u32[]', space=smem, size = 0x4, offset = 0x4, fixed_abs, tag = 'smem constant byte address 0x4 - core index']
  #allocation1 [shape = 'u32[144,128]{1,0:T(1,128)}', space=vmem, size = 0x12000, scoped, tag = 'internal scratch']
  #allocation2 [shape = 'f32[10,32,24]{2,1,0:T(8,128)}', space=vmem, size = 0x28000, scoped, tag = 'scratch operand']
  %s0 = inlined_call_operand.vmem [shape: f32[2,16,16,4], index: 0, kind: input, shape index: {}]
  %s1 = inlined_call_operand.vmem [shape: f32[2,16,16,4], index: 1, kind: input, shape index: {}]
  %s2 = inlined_call_operand.vmem [shape: f32[2,16,16,4], index: 2, kind: input, shape index: {}]
  %s3 = inlined_call_operand.vmem [shape: bf16[4,24], index: 3, kind: input, shape index: {}]
  %s4 = inlined_call_operand.vmem [shape: f32[1,24], index: 4, kind: input, shape index: {}]
  %s5 = inlined_call_operand.vmem [shape: f32[3,3,24], index: 5, kind: input, shape index: {}]
  %s6 = inlined_call_operand.vmem [shape: f32[1,24], index: 6, kind: input, shape index: {}]
  %s7 = inlined_call_operand.vmem [shape: bf16[24,4], index: 7, kind: input, shape index: {}]
  %s8 = inlined_call_operand.vmem [shape: f32[1,4], index: 8, kind: input, shape index: {}]
  %s9 = inlined_call_operand.vmem [shape: f32[2,16,16,4], index: 9, kind: output, shape index: {}]
  %s10 = sld [smem:[#allocation0]]
  $region85: #{tpu_custom_call.1} parent=0
    _
  %s12 = ssub.s32 1, %s10
  %s13 = scalar_select 0, %s12, %s10
  loop: start=0, step=1, limit=6
  $region2: #{tpu_custom_call.1} parent=0 // loop_pre_header
    _
  $region3: #{tpu_custom_call.1} parent=0 // loop_header
    %s15 = sphi 0, %s19
    %p16 = scmp.ge.s32.totalorder %s15, 6
    %s22 = sphi 0, %s34
    %s23 = sphi 0, %s30
    %s24 = sphi 0, %s22
    %s25 = sphi 0, %s23
    %s26 = sphi 0, %s24
    %s27 = sphi 0, %s25
    %s39 = sphi 0, %s41
    %s42 = sphi 0, %s39
    %s43 = sphi 0, %s42
    %s59 = sphi 0, %s43
    %s75 = sphi 0, %s77
    %s78 = sphi 0, %s75
    %s79 = sphi 0, %s78
    %s95 = sphi 0, %s79
    %s111 = sphi 0, %s113
    %s114 = sphi 0, %s111
    %s115 = sphi 0, %s114
    %s131 = sphi 0, %s115
    %s135 = sphi 0, %s135
    %s137 = sphi 0, %s135
    %s138 = sphi 0, %s137
    %s152 = sphi 0, %s138
    %s156 = sphi 0, %s156
    %s158 = sphi 0, %s156
    %s159 = sphi 0, %s158
    %s173 = sphi 0, %s159
    %s177 = sphi 0, %s177
    %s179 = sphi 0, %s177
    %s180 = sphi 0, %s179
    %s194 = sphi 0, %s180
    %s198 = sphi 0, %s198
    %s200 = sphi 0, %s198
    %s201 = sphi 0, %s200
    %s215 = sphi 0, %s201
    %s219 = sphi 0, %s219
    %s221 = sphi 0, %s219
    %s222 = sphi 0, %s221
    %s236 = sphi 0, %s222
    %s240 = sphi 0, %s240
    %s242 = sphi 0, %s240
    %s243 = sphi 0, %s242
    %s257 = sphi 0, %s243
    %s265 = sphi 0, %s267
    %s268 = sphi 0, %s265
    %s269 = sphi 0, %s268
    %s285 = sphi 0, %s269
  $region4: #{tpu_custom_call.1} parent=0 // loop_header_branch
    %18 = sbr.rel (%p16) target = $region8
  $region5: #{tpu_custom_call.1} parent=0 // loop_body
    %s20 = ssub.s32 %s15, 1
    %s21 = ssub.s32 %s15, 2
    %s28 = sadd.s32 1, %s23
    %p29 = scmp.ge.s32.totalorder %s28, 2
    %s30 = scalar_select %p29, 0, %s28
    %s31 = sadd.s32 1, %s22
    %s32 = scalar_select %p29, %s31, %s22
    %p33 = scmp.ge.s32.totalorder %s32, 2
    %s34 = scalar_select %p33, 0, %s32
    %s35 = ssub.s32 %s22, %s34
    %s36 = ssub.s32 %s23, %s30
    %s37 = sor.u32 %s35, %s36
    %p38 = scmp.eq.s32.totalorder %s37, 0
    %s40 = sadd.s32 %s39, 1
    %s41 = scalar_select %p38, %s39, %s40
    %p44 = pneg %p38
    %p45 = scmp.eq.s32.totalorder %s15, 3
    %p46 = por %p44, %p45
    %p47 = scmp.ne.s32.totalorder %s39, %s42
    %p48 = scmp.eq.s32.totalorder %s15, 0
    %p49 = por %p47, %p48
    %p50 = scmp.ne.s32.totalorder %s39, %s42
    %p51 = scmp.eq.s32.totalorder %s20, 3
    %p52 = por %p50, %p51
    %p53 = scmp.ne.s32.totalorder %s42, %s43
    %p54 = scmp.eq.s32.totalorder %s20, 0
    %p55 = por %p53, %p54
    %p56 = scmp.ne.s32.totalorder %s42, %s43
    %p57 = scmp.eq.s32.totalorder %s21, 3
    %p58 = por %p56, %p57
    %p60 = scmp.ne.s32.totalorder %s43, %s59
    %p61 = scmp.eq.s32.totalorder %s21, 0
    %p62 = por %p60, %p61
    %s63 = smul.u32 %s23, 8
    %s64 = ssub.s32 %s63, 1
    %p65 = scmp.gt.s32.totalorder %s64, 0
    %s66 = scalar_select %p65, %s64, 0
    %s67 = smul.u32 %s30, 8
    %s68 = ssub.s32 %s67, 1
    %p69 = scmp.gt.s32.totalorder %s68, 0
    %s70 = scalar_select %p69, %s68, 0
    %s71 = ssub.s32 %s22, %s34
    %s72 = ssub.s32 %s66, %s70
    %s73 = sor.u32 %s71, %s72
    %p74 = scmp.eq.s32.totalorder %s73, 0
    %s76 = sadd.s32 %s75, 1
    %s77 = scalar_select %p74, %s75, %s76
    %p80 = pneg %p74
    %p81 = scmp.eq.s32.totalorder %s15, 3
    %p82 = por %p80, %p81
    %p83 = scmp.ne.s32.totalorder %s75, %s78
    %p84 = scmp.eq.s32.totalorder %s15, 0
    %p85 = por %p83, %p84
    %p86 = scmp.ne.s32.totalorder %s75, %s78
    %p87 = scmp.eq.s32.totalorder %s20, 3
    %p88 = por %p86, %p87
    %p89 = scmp.ne.s32.totalorder %s78, %s79
    %p90 = scmp.eq.s32.totalorder %s20, 0
    %p91 = por %p89, %p90
    %p92 = scmp.ne.s32.totalorder %s78, %s79
    %p93 = scmp.eq.s32.totalorder %s21, 3
    %p94 = por %p92, %p93
    %p96 = scmp.ne.s32.totalorder %s79, %s95
    %p97 = scmp.eq.s32.totalorder %s21, 0
    %p98 = por %p96, %p97
    %s99 = sadd.s32 %s23, 1
    %s100 = smul.u32 %s99, 8
    %p101 = scmp.lt.s32.totalorder %s100, 15
    %s102 = scalar_select %p101, %s100, 15
    %s103 = sadd.s32 %s30, 1
    %s104 = smul.u32 %s103, 8
    %p105 = scmp.lt.s32.totalorder %s104, 15
    %s106 = scalar_select %p105, %s104, 15
    %s107 = ssub.s32 %s22, %s34
    %s108 = ssub.s32 %s102, %s106
    %s109 = sor.u32 %s107, %s108
    %p110 = scmp.eq.s32.totalorder %s109, 0
    %s112 = sadd.s32 %s111, 1
    %s113 = scalar_select %p110, %s111, %s112
    %p116 = pneg %p110
    %p117 = scmp.eq.s32.totalorder %s15, 3
    %p118 = por %p116, %p117
    %p119 = scmp.ne.s32.totalorder %s111, %s114
    %p120 = scmp.eq.s32.totalorder %s15, 0
    %p121 = por %p119, %p120
    %p122 = scmp.ne.s32.totalorder %s111, %s114
    %p123 = scmp.eq.s32.totalorder %s20, 3
    %p124 = por %p122, %p123
    %p125 = scmp.ne.s32.totalorder %s114, %s115
    %p126 = scmp.eq.s32.totalorder %s20, 0
    %p127 = por %p125, %p126
    %p128 = scmp.ne.s32.totalorder %s114, %s115
    %p129 = scmp.eq.s32.totalorder %s21, 3
    %p130 = por %p128, %p129
    %p132 = scmp.ne.s32.totalorder %s115, %s131
    %p133 = scmp.eq.s32.totalorder %s21, 0
    %p134 = por %p132, %p133
    %s136 = sadd.s32 %s135, 1
    %p139 = scmp.eq.s32.totalorder %s15, 3
    %p140 = scmp.ne.s32.totalorder %s135, %s137
    %p141 = scmp.eq.s32.totalorder %s15, 0
    %p142 = por %p140, %p141
    %p143 = scmp.ne.s32.totalorder %s135, %s137
    %p144 = scmp.eq.s32.totalorder %s20, 3
    %p145 = por %p143, %p144
    %p146 = scmp.ne.s32.totalorder %s137, %s138
    %p147 = scmp.eq.s32.totalorder %s20, 0
    %p148 = por %p146, %p147
    %p149 = scmp.ne.s32.totalorder %s137, %s138
    %p150 = scmp.eq.s32.totalorder %s21, 3
    %p151 = por %p149, %p150
    %p153 = scmp.ne.s32.totalorder %s138, %s152
    %p154 = scmp.eq.s32.totalorder %s21, 0
    %p155 = por %p153, %p154
    %s157 = sadd.s32 %s156, 1
    %p160 = scmp.eq.s32.totalorder %s15, 3
    %p161 = scmp.ne.s32.totalorder %s156, %s158
    %p162 = scmp.eq.s32.totalorder %s15, 0
    %p163 = por %p161, %p162
    %p164 = scmp.ne.s32.totalorder %s156, %s158
    %p165 = scmp.eq.s32.totalorder %s20, 3
    %p166 = por %p164, %p165
    %p167 = scmp.ne.s32.totalorder %s158, %s159
    %p168 = scmp.eq.s32.totalorder %s20, 0
    %p169 = por %p167, %p168
    %p170 = scmp.ne.s32.totalorder %s158, %s159
    %p171 = scmp.eq.s32.totalorder %s21, 3
    %p172 = por %p170, %p171
    %p174 = scmp.ne.s32.totalorder %s159, %s173
    %p175 = scmp.eq.s32.totalorder %s21, 0
    %p176 = por %p174, %p175
    %s178 = sadd.s32 %s177, 1
    %p181 = scmp.eq.s32.totalorder %s15, 3
    %p182 = scmp.ne.s32.totalorder %s177, %s179
    %p183 = scmp.eq.s32.totalorder %s15, 0
    %p184 = por %p182, %p183
    %p185 = scmp.ne.s32.totalorder %s177, %s179
    %p186 = scmp.eq.s32.totalorder %s20, 3
    %p187 = por %p185, %p186
    %p188 = scmp.ne.s32.totalorder %s179, %s180
    %p189 = scmp.eq.s32.totalorder %s20, 0
    %p190 = por %p188, %p189
    %p191 = scmp.ne.s32.totalorder %s179, %s180
    %p192 = scmp.eq.s32.totalorder %s21, 3
    %p193 = por %p191, %p192
    %p195 = scmp.ne.s32.totalorder %s180, %s194
    %p196 = scmp.eq.s32.totalorder %s21, 0
    %p197 = por %p195, %p196
    %s199 = sadd.s32 %s198, 1
    %p202 = scmp.eq.s32.totalorder %s15, 3
    %p203 = scmp.ne.s32.totalorder %s198, %s200
    %p204 = scmp.eq.s32.totalorder %s15, 0
    %p205 = por %p203, %p204
    %p206 = scmp.ne.s32.totalorder %s198, %s200
    %p207 = scmp.eq.s32.totalorder %s20, 3
    %p208 = por %p206, %p207
    %p209 = scmp.ne.s32.totalorder %s200, %s201
    %p210 = scmp.eq.s32.totalorder %s20, 0
    %p211 = por %p209, %p210
    %p212 = scmp.ne.s32.totalorder %s200, %s201
    %p213 = scmp.eq.s32.totalorder %s21, 3
    %p214 = por %p212, %p213
    %p216 = scmp.ne.s32.totalorder %s201, %s215
    %p217 = scmp.eq.s32.totalorder %s21, 0
    %p218 = por %p216, %p217
    %s220 = sadd.s32 %s219, 1
    %p223 = scmp.eq.s32.totalorder %s15, 3
    %p224 = scmp.ne.s32.totalorder %s219, %s221
    %p225 = scmp.eq.s32.totalorder %s15, 0
    %p226 = por %p224, %p225
    %p227 = scmp.ne.s32.totalorder %s219, %s221
    %p228 = scmp.eq.s32.totalorder %s20, 3
    %p229 = por %p227, %p228
    %p230 = scmp.ne.s32.totalorder %s221, %s222
    %p231 = scmp.eq.s32.totalorder %s20, 0
    %p232 = por %p230, %p231
    %p233 = scmp.ne.s32.totalorder %s221, %s222
    %p234 = scmp.eq.s32.totalorder %s21, 3
    %p235 = por %p233, %p234
    %p237 = scmp.ne.s32.totalorder %s222, %s236
    %p238 = scmp.eq.s32.totalorder %s21, 0
    %p239 = por %p237, %p238
    %s241 = sadd.s32 %s240, 1
    %p244 = scmp.eq.s32.totalorder %s15, 3
    %p245 = scmp.ne.s32.totalorder %s240, %s242
    %p246 = scmp.eq.s32.totalorder %s15, 0
    %p247 = por %p245, %p246
    %p248 = scmp.ne.s32.totalorder %s240, %s242
    %p249 = scmp.eq.s32.totalorder %s20, 3
    %p250 = por %p248, %p249
    %p251 = scmp.ne.s32.totalorder %s242, %s243
    %p252 = scmp.eq.s32.totalorder %s20, 0
    %p253 = por %p251, %p252
    %p254 = scmp.ne.s32.totalorder %s242, %s243
    %p255 = scmp.eq.s32.totalorder %s21, 3
    %p256 = por %p254, %p255
    %p258 = scmp.ne.s32.totalorder %s243, %s257
    %p259 = scmp.eq.s32.totalorder %s21, 0
    %p260 = por %p258, %p259
    %s261 = ssub.s32 %s22, %s34
    %s262 = ssub.s32 %s23, %s30
    %s263 = sor.u32 %s261, %s262
    %p264 = scmp.eq.s32.totalorder %s263, 0
    %s266 = sadd.s32 %s265, 1
    %s267 = scalar_select %p264, %s265, %s266
    %p270 = pneg %p264
    %p271 = scmp.eq.s32.totalorder %s15, 3
    %p272 = por %p270, %p271
    %p273 = scmp.ne.s32.totalorder %s265, %s268
    %p274 = scmp.eq.s32.totalorder %s15, 0
    %p275 = por %p273, %p274
    %p276 = scmp.ne.s32.totalorder %s265, %s268
    %p277 = scmp.eq.s32.totalorder %s20, 3
    %p278 = por %p276, %p277
    %p279 = scmp.ne.s32.totalorder %s268, %s269
    %p280 = scmp.eq.s32.totalorder %s20, 0
    %p281 = por %p279, %p280
    %p282 = scmp.ne.s32.totalorder %s268, %s269
    %p283 = scmp.eq.s32.totalorder %s21, 3
    %p284 = por %p282, %p283
    %p286 = scmp.ne.s32.totalorder %s269, %s285
    %p287 = scmp.eq.s32.totalorder %s21, 0
    %p288 = por %p286, %p287
    %p289 = scmp.le.s32.totalorder 1, %s15
    %p290 = scmp.lt.s32.totalorder %s15, 5
    %p291 = pnand %p289, %p290
    %p292 = pneg %p291
    // Predicated region
    $region9: #{tpu_custom_call.1} parent=5 // pred_check
      _
    $region10: #{tpu_custom_call.1} parent=5 // pred_check_branch
      %294 = sbr.rel (%p291) target = $region12
    $region11: #{tpu_custom_call.1} parent=5 // pred_region
      %s295 = ssub.s32 %s15, 1
      // Predicated region
      $region13: #{tpu_custom_call.1} parent=11 // pred_check
        %p296 = pneg %p148
      $region14: #{tpu_custom_call.1} parent=11 // pred_check_branch
        %298 = sbr.rel (%p296) target = $region16
      $region15: #{tpu_custom_call.1} parent=11 // pred_region
        _
      $region16: #{tpu_custom_call.1} parent=11 // pred_fallthru
        _
      // Predicated region
      $region17: #{tpu_custom_call.1} parent=11 // pred_check
        %p299 = pneg %p169
      $region18: #{tpu_custom_call.1} parent=11 // pred_check_branch
        %301 = sbr.rel (%p299) target = $region20
      $region19: #{tpu_custom_call.1} parent=11 // pred_region
        _
      $region20: #{tpu_custom_call.1} parent=11 // pred_fallthru
        _
      // Predicated region
      $region21: #{tpu_custom_call.1} parent=11 // pred_check
        %p302 = pneg %p190
      $region22: #{tpu_custom_call.1} parent=11 // pred_check_branch
        %304 = sbr.rel (%p302) target = $region24
      $region23: #{tpu_custom_call.1} parent=11 // pred_region
        _
      $region24: #{tpu_custom_call.1} parent=11 // pred_fallthru
        _
      // Predicated region
      $region25: #{tpu_custom_call.1} parent=11 // pred_check
        %p305 = pneg %p211
      $region26: #{tpu_custom_call.1} parent=11 // pred_check_branch
        %307 = sbr.rel (%p305) target = $region28
      $region27: #{tpu_custom_call.1} parent=11 // pred_region
        _
      $region28: #{tpu_custom_call.1} parent=11 // pred_fallthru
        _
      // Predicated region
      $region29: #{tpu_custom_call.1} parent=11 // pred_check
        %p308 = pneg %p232
      $region30: #{tpu_custom_call.1} parent=11 // pred_check_branch
        %310 = sbr.rel (%p308) target = $region32
      $region31: #{tpu_custom_call.1} parent=11 // pred_region
        _
      $region32: #{tpu_custom_call.1} parent=11 // pred_fallthru
        _
      // Predicated region
      $region33: #{tpu_custom_call.1} parent=11 // pred_check
        %p311 = pneg %p253
      $region34: #{tpu_custom_call.1} parent=11 // pred_check_branch
        %313 = sbr.rel (%p311) target = $region36
      $region35: #{tpu_custom_call.1} parent=11 // pred_region
        _
      $region36: #{tpu_custom_call.1} parent=11 // pred_fallthru
        _
    $region12: #{tpu_custom_call.1} parent=5 // pred_fallthru
      _
    %p314 = scmp.lt.s32.totalorder %s15, 4
    // Predicated region
    $region37: #{tpu_custom_call.1} parent=5 // pred_check
      %p315 = pneg %p314
    $region38: #{tpu_custom_call.1} parent=5 // pred_check_branch
      %317 = sbr.rel (%p315) target = $region40
    $region39: #{tpu_custom_call.1} parent=5 // pred_region
      // Predicated region
      $region41: #{tpu_custom_call.1} parent=39 // pred_check
        %p318 = pneg %p49
      $region42: #{tpu_custom_call.1} parent=39 // pred_check_branch
        %320 = sbr.rel (%p318) target = $region44
      $region43: #{tpu_custom_call.1} parent=39 // pred_region
        %s321 = smul.u32 8, %s23
        %p322 = scmp.lt.s32.totalorder %s22, 1
        %s323 = scalar_select %p322, %s22, 1
        %p324 = scmp.lt.s32.totalorder %s321, 15
        %s325 = scalar_select %p324, %s321, 15
        %s326 = smul.addr %s325, 2
        %s327 = smul.addr %s323, 32
        %s328 = sadd.s32 %s326, %s327
        %s329 = smul.addr %s328, 8
        %s330 = scalar_lea.vmem %s0, %s329
        %s331 = smul.u32 8, %s23
      $region44: #{tpu_custom_call.1} parent=39 // pred_fallthru
        _
      // Predicated region
      $region45: #{tpu_custom_call.1} parent=39 // pred_check
        %p332 = pneg %p85
      $region46: #{tpu_custom_call.1} parent=39 // pred_check_branch
        %334 = sbr.rel (%p332) target = $region48
      $region47: #{tpu_custom_call.1} parent=39 // pred_region
        %s335 = smul.u32 %s23, 8
        %s336 = ssub.s32 %s335, 1
        %p337 = scmp.gt.s32.totalorder %s336, 0
        %s338 = scalar_select %p337, %s336, 0
        %p339 = scmp.lt.s32.totalorder %s22, 1
        %s340 = scalar_select %p339, %s22, 1
        %p341 = scmp.lt.s32.totalorder %s338, 15
        %s342 = scalar_select %p341, %s338, 15
        %s343 = smul.addr %s342, 2
        %s344 = smul.addr %s340, 32
        %s345 = sadd.s32 %s343, %s344
        %s346 = smul.addr %s345, 8
        %s347 = scalar_lea.vmem %s1, %s346
        %s348 = smul.u32 %s23, 8
        %s349 = ssub.s32 %s348, 1
        %p350 = scmp.gt.s32.totalorder %s349, 0
        %s351 = scalar_select %p350, %s349, 0
      $region48: #{tpu_custom_call.1} parent=39 // pred_fallthru
        _
      // Predicated region
      $region49: #{tpu_custom_call.1} parent=39 // pred_check
        %p352 = pneg %p121
      $region50: #{tpu_custom_call.1} parent=39 // pred_check_branch
        %354 = sbr.rel (%p352) target = $region52
      $region51: #{tpu_custom_call.1} parent=39 // pred_region
        %s355 = sadd.s32 %s23, 1
        %s356 = smul.u32 %s355, 8
        %p357 = scmp.lt.s32.totalorder %s356, 15
        %s358 = scalar_select %p357, %s356, 15
        %p359 = scmp.lt.s32.totalorder %s22, 1
        %s360 = scalar_select %p359, %s22, 1
        %p361 = scmp.lt.s32.totalorder %s358, 15
        %s362 = scalar_select %p361, %s358, 15
        %s363 = smul.addr %s362, 2
        %s364 = smul.addr %s360, 32
        %s365 = sadd.s32 %s363, %s364
        %s366 = smul.addr %s365, 8
        %s367 = scalar_lea.vmem %s2, %s366
        %s368 = sadd.s32 %s23, 1
        %s369 = smul.u32 %s368, 8
        %p370 = scmp.lt.s32.totalorder %s369, 15
        %s371 = scalar_select %p370, %s369, 15
      $region52: #{tpu_custom_call.1} parent=39 // pred_fallthru
        _
    $region40: #{tpu_custom_call.1} parent=5 // pred_fallthru
      _
    %p372 = scmp.le.s32.totalorder 1, %s15
    %p373 = scmp.lt.s32.totalorder %s15, 5
    %p374 = pnand %p372, %p373
    %p375 = pneg %p374
    // Predicated region
    $region53: #{tpu_custom_call.1} parent=5 // pred_check
      _
    $region54: #{tpu_custom_call.1} parent=5 // pred_check_branch
      %377 = sbr.rel (%p374) target = $region56
    $region55: #{tpu_custom_call.1} parent=5 // pred_region
      %s378 = ssub.s32 %s15, 1
      %s379 = smul.u32 8, %s25
      %p380 = scmp.lt.s32.totalorder %s24, 1
      %s381 = scalar_select %p380, %s24, 1
      %p382 = scmp.lt.s32.totalorder %s379, 15
      %s383 = scalar_select %p382, %s379, 15
      %s384 = smul.addr %s383, 2
      %s385 = smul.addr %s381, 32
      %s386 = sadd.s32 %s384, %s385
      %s387 = smul.addr %s386, 8
      %s388 = scalar_lea.vmem %s0, %s387
      %p389 = pneg %p55
      %p390 = pneg %p52
      %s391 = smul.u32 %s25, 8
      %s392 = ssub.s32 %s391, 1
      %p393 = scmp.gt.s32.totalorder %s392, 0
      %s394 = scalar_select %p393, %s392, 0
      %p395 = scmp.lt.s32.totalorder %s24, 1
      %s396 = scalar_select %p395, %s24, 1
      %p397 = scmp.lt.s32.totalorder %s394, 15
      %s398 = scalar_select %p397, %s394, 15
      %s399 = smul.addr %s398, 2
      %s400 = smul.addr %s396, 32
      %s401 = sadd.s32 %s399, %s400
      %s402 = smul.addr %s401, 8
      %s403 = scalar_lea.vmem %s1, %s402
      %p404 = pneg %p91
      %p405 = pneg %p88
      %s406 = sadd.s32 %s25, 1
      %s407 = smul.u32 %s406, 8
      %p408 = scmp.lt.s32.totalorder %s407, 15
      %s409 = scalar_select %p408, %s407, 15
      %p410 = scmp.lt.s32.totalorder %s24, 1
      %s411 = scalar_select %p410, %s24, 1
      %p412 = scmp.lt.s32.totalorder %s409, 15
      %s413 = scalar_select %p412, %s409, 15
      %s414 = smul.addr %s413, 2
      %s415 = smul.addr %s411, 32
      %s416 = sadd.s32 %s414, %s415
      %s417 = smul.addr %s416, 8
      %s418 = scalar_lea.vmem %s2, %s417
      %p419 = pneg %p127
      %p420 = pneg %p124
      %p421 = pneg %p148
      %p422 = pneg %p145
      %p423 = pneg %p169
      %p424 = pneg %p166
      %p425 = pneg %p190
      %p426 = pneg %p187
      %p427 = pneg %p211
      %p428 = pneg %p208
      %p429 = pneg %p232
      %p430 = pneg %p229
      %p431 = pneg %p253
      %p432 = pneg %p250
      %p433 = pneg %p281
      %p434 = pneg %p278
      %s435 = smul.u32 8, %s25
      %p436 = scmp.lt.s32.totalorder %s24, 1
      %s437 = scalar_select %p436, %s24, 1
      %p438 = scmp.lt.s32.totalorder %s435, 15
      %s439 = scalar_select %p438, %s435, 15
      %s440 = smul.addr %s439, 2
      %s441 = smul.addr %s437, 32
      %s442 = sadd.s32 %s440, %s441
      %s443 = smul.addr %s442, 8
      %s444 = scalar_lea.vmem %s9, %s443
      %s445 = smul.u32 8, %s25
      %p446 = scmp.lt.s32.totalorder %s24, 1
      %s447 = scalar_select %p446, %s24, 1
      %p448 = scmp.lt.s32.totalorder %s445, 15
      %s449 = scalar_select %p448, %s445, 15
      %s450 = smul.addr %s449, 2
      %s451 = smul.addr %s447, 32
      %s452 = sadd.s32 %s450, %s451
      %s453 = smul.addr %s452, 8
      %s454 = scalar_lea.vmem %s0, %s453
      %s455 = smul.u32 8, %s25
      %s456 = smul.u32 %s25, 8
      %s457 = ssub.s32 %s456, 1
      %p458 = scmp.gt.s32.totalorder %s457, 0
      %s459 = scalar_select %p458, %s457, 0
      %p460 = scmp.lt.s32.totalorder %s24, 1
      %s461 = scalar_select %p460, %s24, 1
      %p462 = scmp.lt.s32.totalorder %s459, 15
      %s463 = scalar_select %p462, %s459, 15
      %s464 = smul.addr %s463, 2
      %s465 = smul.addr %s461, 32
      %s466 = sadd.s32 %s464, %s465
      %s467 = smul.addr %s466, 8
      %s468 = scalar_lea.vmem %s1, %s467
      %s469 = smul.u32 %s25, 8
      %s470 = ssub.s32 %s469, 1
      %p471 = scmp.gt.s32.totalorder %s470, 0
      %s472 = scalar_select %p471, %s470, 0
      %s473 = sadd.s32 %s25, 1
      %s474 = smul.u32 %s473, 8
      %p475 = scmp.lt.s32.totalorder %s474, 15
      %s476 = scalar_select %p475, %s474, 15
      %p477 = scmp.lt.s32.totalorder %s24, 1
      %s478 = scalar_select %p477, %s24, 1
      %p479 = scmp.lt.s32.totalorder %s476, 15
      %s480 = scalar_select %p479, %s476, 15
      %s481 = smul.addr %s480, 2
      %s482 = smul.addr %s478, 32
      %s483 = sadd.s32 %s481, %s482
      %s484 = smul.addr %s483, 8
      %s485 = scalar_lea.vmem %s2, %s484
      %s486 = sadd.s32 %s25, 1
      %s487 = smul.u32 %s486, 8
      %p488 = scmp.lt.s32.totalorder %s487, 15
      %s489 = scalar_select %p488, %s487, 15
      %s490 = smul.u32 8, %s25
      %p491 = scmp.lt.s32.totalorder %s24, 1
      %s492 = scalar_select %p491, %s24, 1
      %p493 = scmp.lt.s32.totalorder %s490, 15
      %s494 = scalar_select %p493, %s490, 15
      %s495 = smul.addr %s494, 2
      %s496 = smul.addr %s492, 32
      %s497 = sadd.s32 %s495, %s496
      %s498 = smul.addr %s497, 8
      %s499 = scalar_lea.vmem %s9, %s498
      %s500 = smul.u32 8, %s25
      %vm502 = vcmask 195584
      %503 = vst.msk [vmem:[#allocation2] sm:$0xff] %vm502, 0.0
      %504 = vst.msk [vmem:[#allocation2 + $0x20] sm:$0xff] %vm502, 0.0
      %505 = vst.msk [vmem:[#allocation2 + $0x40] sm:$0xff] %vm502, 0.0
      %506 = vst.msk [vmem:[#allocation2 + $0x60] sm:$0xff] %vm502, 0.0
      %507 = vst.msk [vmem:[#allocation2 + $0x80] sm:$0xff] %vm502, 0.0
      %508 = vst.msk [vmem:[#allocation2 + $0xa0] sm:$0xff] %vm502, 0.0
      %509 = vst.msk [vmem:[#allocation2 + $0xc0] sm:$0xff] %vm502, 0.0
      %510 = vst.msk [vmem:[#allocation2 + $0xe0] sm:$0xff] %vm502, 0.0
      %511 = vst.msk [vmem:[#allocation2 + $0x100] sm:$0xff] %vm502, 0.0
      %512 = vst.msk [vmem:[#allocation2 + $0x120] sm:$0xff] %vm502, 0.0
      %513 = vst.msk [vmem:[#allocation2 + $0x18] sm:$0xff] %vm502, 0.0
      %514 = vst.msk [vmem:[#allocation2 + $0x38] sm:$0xff] %vm502, 0.0
      %515 = vst.msk [vmem:[#allocation2 + $0x58] sm:$0xff] %vm502, 0.0
      %516 = vst.msk [vmem:[#allocation2 + $0x78] sm:$0xff] %vm502, 0.0
      %517 = vst.msk [vmem:[#allocation2 + $0x98] sm:$0xff] %vm502, 0.0
      %518 = vst.msk [vmem:[#allocation2 + $0xb8] sm:$0xff] %vm502, 0.0
      %519 = vst.msk [vmem:[#allocation2 + $0xd8] sm:$0xff] %vm502, 0.0
      %520 = vst.msk [vmem:[#allocation2 + $0xf8] sm:$0xff] %vm502, 0.0
      %521 = vst.msk [vmem:[#allocation2 + $0x118] sm:$0xff] %vm502, 0.0
      %522 = vst.msk [vmem:[#allocation2 + $0x138] sm:$0xff] %vm502, 0.0
      %v523 = vld [vmem:[%s454] sm:$0xff]
      %v524 = vld [vmem:[%s454 + $0x8] sm:$0xff]
      %v525 = vld [vmem:[%s454 + $0x10] sm:$0xff]
      %v526 = vld [vmem:[%s454 + $0x18] sm:$0xff]
      %v527 = vld [vmem:[%s454 + $0x20] sm:$0xff]
      %v528 = vld [vmem:[%s454 + $0x28] sm:$0xff]
      %v529 = vld [vmem:[%s454 + $0x30] sm:$0xff]
      %v530 = vld [vmem:[%s454 + $0x38] sm:$0xff]
      %v531 = vld [vmem:[%s454 + $0x40] sm:$0xff]
      %v532 = vld [vmem:[%s454 + $0x48] sm:$0xff]
      %v533 = vld [vmem:[%s454 + $0x50] sm:$0xff]
      %v534 = vld [vmem:[%s454 + $0x58] sm:$0xff]
      %v535 = vld [vmem:[%s454 + $0x60] sm:$0xff]
      %v536 = vld [vmem:[%s454 + $0x68] sm:$0xff]
      %v537 = vld [vmem:[%s454 + $0x70] sm:$0xff]
      %v538 = vld [vmem:[%s454 + $0x78] sm:$0xff]
      %v539 = vpack.c.bf16 %v524, %v523
      %v540 = vpack.c.bf16 %v526, %v525
      %v541 = vpack.c.bf16 %v528, %v527
      %v542 = vpack.c.bf16 %v530, %v529
      %v543 = vpack.c.bf16 %v532, %v531
      %v544 = vpack.c.bf16 %v534, %v533
      %v545 = vpack.c.bf16 %v536, %v535
      %v546 = vpack.c.bf16 %v538, %v537
      %v547 = vld [vmem:[%s3] sm:$0x3]
      %v548 = vld [vmem:[%s4] sm:$0x1]
      %v550 = vlaneseq
      %v551 = vshrl.u32 %v550, 7
      %v552 = vsub.s32 0, %v551
      %v553 = vrot.slane %v548, %v552
      %vm555 = vcmask 31744
      %v557 = vsel %vm555, %v539, 0
      %v560 = vsel %vm555, %v540, 0
      %v563 = vsel %vm555, %v541, 0
      %v566 = vsel %vm555, %v542, 0
      %v569 = vsel %vm555, %v543, 0
      %v572 = vsel %vm555, %v544, 0
      %v575 = vsel %vm555, %v545, 0
      %v578 = vsel %vm555, %v546, 0
      %vm580 = vcmask 1041408
      %v582 = vsel %vm580, %v547, 0
      %584 = vmatprep.subr.bf16.mxu0 0
      %585 = vmatpush1.bf16.msra.mxu0 0
      %586 = vmatprep.subr.bf16.mxu0 0
      %587 = vmatpush1.bf16.msra.mxu0 0
      %588 = vmatprep.subr.bf16.mxu0 0
      %589 = vmatpush1.bf16.msra.mxu0 0
      %590 = vmatprep.subr.bf16.mxu0 0
      %591 = vmatpush1.bf16.msra.mxu0 0
      %592 = vmatprep.subr.bf16.mxu0 0
      %593 = vmatpush1.bf16.msra.mxu0 0
      %594 = vmatprep.subr.bf16.mxu0 0
      %595 = vmatpush1.bf16.msra.mxu0 0
      %596 = vmatprep.subr.bf16.mxu0 0
      %597 = vmatpush1.bf16.msra.mxu0 0
      %598 = vmatprep.subr.bf16.mxu0 0
      %599 = vmatpush1.bf16.msra.mxu0 %v582
      %600 = vmatprep.subr.bf16.mxu0 0
      %601 = vmatpush2.bf16.msra.mxu0 0
      %602 = vmatprep.subr.bf16.mxu0 0
      %603 = vmatpush2.bf16.msra.mxu0 0
      %604 = vmatprep.subr.bf16.mxu0 0
      %605 = vmatpush2.bf16.msra.mxu0 0
      %606 = vmatprep.subr.bf16.mxu0 0
      %607 = vmatpush2.bf16.msra.mxu0 0
      %608 = vmatprep.subr.bf16.mxu0 0
      %609 = vmatpush2.bf16.msra.mxu0 0
      %610 = vmatprep.subr.bf16.mxu0 0
      %611 = vmatpush2.bf16.msra.mxu0 0
      %612 = vmatprep.subr.bf16.mxu0 0
      %613 = vmatpush2.bf16.msra.mxu0 0
      %614 = vmatprep.subr.bf16.mxu0 0
      %615 = vmatpush2.bf16.msra.mxu0 0
      %616 = vmatprep.mubr.bf16.mxu0 0
      %617 = vmatmul.mubr.bf16.gmra.mxu0 %v557
      %v618 = vpop.f32.mrf.mxu0
      %v619 = vadd.f32 %v553, %v618
      %v620 = vpop.f32.mrf.mxu0
      %v621 = vpop.f32.mrf.mxu0
      %v622 = vadd.f32 %v553, %v621
      %v623 = vpop.f32.mrf.mxu0
      %624 = vmatprep.mubr.bf16.mxu0 0
      %625 = vmatmul.mubr.bf16.gmra.mxu0 %v560
      %v626 = vpop.f32.mrf.mxu0
      %v627 = vadd.f32 %v553, %v626
      %v628 = vpop.f32.mrf.mxu0
      %v629 = vpop.f32.mrf.mxu0
      %v630 = vadd.f32 %v553, %v629
      %v631 = vpop.f32.mrf.mxu0
      %632 = vmatprep.mubr.bf16.mxu0 0
      %633 = vmatmul.mubr.bf16.gmra.mxu0 %v563
      %v634 = vpop.f32.mrf.mxu0
      %v635 = vadd.f32 %v553, %v634
      %v636 = vpop.f32.mrf.mxu0
      %v637 = vpop.f32.mrf.mxu0
      %v638 = vadd.f32 %v553, %v637
      %v639 = vpop.f32.mrf.mxu0
      %640 = vmatprep.mubr.bf16.mxu0 0
      %641 = vmatmul.mubr.bf16.gmra.mxu0 %v566
      %v642 = vpop.f32.mrf.mxu0
      %v643 = vadd.f32 %v553, %v642
      %v644 = vpop.f32.mrf.mxu0
      %v645 = vpop.f32.mrf.mxu0
      %v646 = vadd.f32 %v553, %v645
      %v647 = vpop.f32.mrf.mxu0
      %648 = vmatprep.mubr.bf16.mxu0 0
      %649 = vmatmul.mubr.bf16.gmra.mxu0 %v569
      %v650 = vpop.f32.mrf.mxu0
      %v651 = vadd.f32 %v553, %v650
      %v652 = vpop.f32.mrf.mxu0
      %v653 = vpop.f32.mrf.mxu0
      %v654 = vadd.f32 %v553, %v653
      %v655 = vpop.f32.mrf.mxu0
      %656 = vmatprep.mubr.bf16.mxu0 0
      %657 = vmatmul.mubr.bf16.gmra.mxu0 %v572
      %v658 = vpop.f32.mrf.mxu0
      %v659 = vadd.f32 %v553, %v658
      %v660 = vpop.f32.mrf.mxu0
      %v661 = vpop.f32.mrf.mxu0
      %v662 = vadd.f32 %v553, %v661
      %v663 = vpop.f32.mrf.mxu0
      %664 = vmatprep.mubr.bf16.mxu0 0
      %665 = vmatmul.mubr.bf16.gmra.mxu0 %v575
      %v666 = vpop.f32.mrf.mxu0
      %v667 = vadd.f32 %v553, %v666
      %v668 = vpop.f32.mrf.mxu0
      %v669 = vpop.f32.mrf.mxu0
      %v670 = vadd.f32 %v553, %v669
      %v671 = vpop.f32.mrf.mxu0
      %672 = vmatprep.mubr.bf16.mxu0 0
      %673 = vmatmul.mubr.bf16.gmra.mxu0 %v578
      %v674 = vpop.f32.mrf.mxu0
      %v675 = vadd.f32 %v553, %v674
      %v676 = vpop.f32.mrf.mxu0
      %v677 = vpop.f32.mrf.mxu0
      %v678 = vadd.f32 %v553, %v677
      %v679 = vpop.f32.mrf.mxu0
      %680 = vdwg.mxu0
      %v681 = vmax.f32 %v619, 0.0
      %v682 = vmax.f32 %v622, 0.0
      %v683 = vmax.f32 %v627, 0.0
      %v684 = vmax.f32 %v630, 0.0
      %v685 = vmax.f32 %v635, 0.0
      %v686 = vmax.f32 %v638, 0.0
      %v687 = vmax.f32 %v643, 0.0
      %v688 = vmax.f32 %v646, 0.0
      %v689 = vmax.f32 %v651, 0.0
      %v690 = vmax.f32 %v654, 0.0
      %v691 = vmax.f32 %v659, 0.0
      %v692 = vmax.f32 %v662, 0.0
      %v693 = vmax.f32 %v667, 0.0
      %v694 = vmax.f32 %v670, 0.0
      %v695 = vmax.f32 %v675, 0.0
      %v696 = vmax.f32 %v678, 0.0
      %v697 = vmin.f32 %v681, 6.0
      %v698 = vmin.f32 %v682, 6.0
      %v699 = vmin.f32 %v683, 6.0
      %v700 = vmin.f32 %v684, 6.0
      %v701 = vmin.f32 %v685, 6.0
      %v702 = vmin.f32 %v686, 6.0
      %v703 = vmin.f32 %v687, 6.0
      %v704 = vmin.f32 %v688, 6.0
      %v705 = vmin.f32 %v689, 6.0
      %v706 = vmin.f32 %v690, 6.0
      %v707 = vmin.f32 %v691, 6.0
      %v708 = vmin.f32 %v692, 6.0
      %v709 = vmin.f32 %v693, 6.0
      %v710 = vmin.f32 %v694, 6.0
      %v711 = vmin.f32 %v695, 6.0
      %v712 = vmin.f32 %v696, 6.0
      %s713 = scalar_lea.vmem [#allocation2], 32
      %714 = vst.msk [vmem:[%s713 + $0x8] sm:$0xff] %vm502, %v697
      %715 = vst.msk [vmem:[%s713 + $0x10] sm:$0xff] %vm502, %v698
      %716 = vst.msk [vmem:[%s713 + $0x28] sm:$0xff] %vm502, %v699
      %717 = vst.msk [vmem:[%s713 + $0x30] sm:$0xff] %vm502, %v700
      %718 = vst.msk [vmem:[%s713 + $0x48] sm:$0xff] %vm502, %v701
      %719 = vst.msk [vmem:[%s713 + $0x50] sm:$0xff] %vm502, %v702
      %720 = vst.msk [vmem:[%s713 + $0x68] sm:$0xff] %vm502, %v703
      %721 = vst.msk [vmem:[%s713 + $0x70] sm:$0xff] %vm502, %v704
      %722 = vst.msk [vmem:[%s713 + $0x88] sm:$0xff] %vm502, %v705
      %723 = vst.msk [vmem:[%s713 + $0x90] sm:$0xff] %vm502, %v706
      %724 = vst.msk [vmem:[%s713 + $0xa8] sm:$0xff] %vm502, %v707
      %725 = vst.msk [vmem:[%s713 + $0xb0] sm:$0xff] %vm502, %v708
      %726 = vst.msk [vmem:[%s713 + $0xc8] sm:$0xff] %vm502, %v709
      %727 = vst.msk [vmem:[%s713 + $0xd0] sm:$0xff] %vm502, %v710
      %728 = vst.msk [vmem:[%s713 + $0xe8] sm:$0xff] %vm502, %v711
      %729 = vst.msk [vmem:[%s713 + $0xf0] sm:$0xff] %vm502, %v712
      %p730 = scmp.gt.s32.totalorder %s25, 0
      // Predicated region
      $region57: #{tpu_custom_call.1} parent=55 // pred_check
        %p731 = pneg %p730
      $region58: #{tpu_custom_call.1} parent=55 // pred_check_branch
        %733 = sbr.rel (%p731) target = $region60
      $region59: #{tpu_custom_call.1} parent=55 // pred_region
        %v734 = vld [vmem:[%s468] sm:$0xff]
        %v735 = vld [vmem:[%s468 + $0x8] sm:$0xff]
        %v736 = vpack.c.bf16 %v735, %v734
        %v737 = vld [vmem:[%s3] sm:$0x3]
        %v738 = vld [vmem:[%s4] sm:$0x1]
        %v740 = vlaneseq
        %v741 = vshrl.u32 %v740, 7
        %v742 = vsub.s32 0, %v741
        %v743 = vrot.slane %v738, %v742
        %v746 = vsel %vm555, %v736, 0
        %v749 = vsel %vm580, %v737, 0
        %751 = vmatprep.subr.bf16.mxu0 0
        %752 = vmatpush1.bf16.msra.mxu0 0
        %753 = vmatprep.subr.bf16.mxu0 0
        %754 = vmatpush1.bf16.msra.mxu0 0
        %755 = vmatprep.subr.bf16.mxu0 0
        %756 = vmatpush1.bf16.msra.mxu0 0
        %757 = vmatprep.subr.bf16.mxu0 0
        %758 = vmatpush1.bf16.msra.mxu0 0
        %759 = vmatprep.subr.bf16.mxu0 0
        %760 = vmatpush1.bf16.msra.mxu0 0
        %761 = vmatprep.subr.bf16.mxu0 0
        %762 = vmatpush1.bf16.msra.mxu0 0
        %763 = vmatprep.subr.bf16.mxu0 0
        %764 = vmatpush1.bf16.msra.mxu0 0
        %765 = vmatprep.subr.bf16.mxu0 0
        %766 = vmatpush1.bf16.msra.mxu0 %v749
        %767 = vmatprep.subr.bf16.mxu0 0
        %768 = vmatpush2.bf16.msra.mxu0 0
        %769 = vmatprep.subr.bf16.mxu0 0
        %770 = vmatpush2.bf16.msra.mxu0 0
        %771 = vmatprep.subr.bf16.mxu0 0
        %772 = vmatpush2.bf16.msra.mxu0 0
        %773 = vmatprep.subr.bf16.mxu0 0
        %774 = vmatpush2.bf16.msra.mxu0 0
        %775 = vmatprep.subr.bf16.mxu0 0
        %776 = vmatpush2.bf16.msra.mxu0 0
        %777 = vmatprep.subr.bf16.mxu0 0
        %778 = vmatpush2.bf16.msra.mxu0 0
        %779 = vmatprep.subr.bf16.mxu0 0
        %780 = vmatpush2.bf16.msra.mxu0 0
        %781 = vmatprep.subr.bf16.mxu0 0
        %782 = vmatpush2.bf16.msra.mxu0 0
        %783 = vmatprep.mubr.bf16.mxu0 0
        %784 = vmatmul.mubr.bf16.gmra.mxu0 %v746
        %v785 = vpop.f32.mrf.mxu0
        %v786 = vadd.f32 %v743, %v785
        %v787 = vpop.f32.mrf.mxu0
        %v788 = vpop.f32.mrf.mxu0
        %v789 = vadd.f32 %v743, %v788
        %v790 = vpop.f32.mrf.mxu0
        %791 = vdwg.mxu0
        %v792 = vmax.f32 %v786, 0.0
        %v793 = vmax.f32 %v789, 0.0
        %v794 = vmin.f32 %v792, 6.0
        %v795 = vmin.f32 %v793, 6.0
        %796 = vst.msk [vmem:[#allocation2 + $0x8] sm:$0xff] %vm502, %v794
        %797 = vst.msk [vmem:[#allocation2 + $0x10] sm:$0xff] %vm502, %v795
      $region60: #{tpu_custom_call.1} parent=55 // pred_fallthru
        _
      %p798 = scmp.eq.s32.totalorder %s25, 0
      // Predicated region
      $region61: #{tpu_custom_call.1} parent=55 // pred_check
        %p799 = pneg %p798
      $region62: #{tpu_custom_call.1} parent=55 // pred_check_branch
        %801 = sbr.rel (%p799) target = $region64
      $region63: #{tpu_custom_call.1} parent=55 // pred_region
        %802 = vst.msk [vmem:[#allocation2 + $0x8] sm:$0xff] %vm502, 0.0
        %803 = vst.msk [vmem:[#allocation2 + $0x10] sm:$0xff] %vm502, 0.0
      $region64: #{tpu_custom_call.1} parent=55 // pred_fallthru
        _
      %p804 = scmp.lt.s32.totalorder %s25, 1
      // Predicated region
      $region65: #{tpu_custom_call.1} parent=55 // pred_check
        %p805 = pneg %p804
      $region66: #{tpu_custom_call.1} parent=55 // pred_check_branch
        %807 = sbr.rel (%p805) target = $region68
      $region67: #{tpu_custom_call.1} parent=55 // pred_region
        %v808 = vld [vmem:[%s485] sm:$0xff]
        %v809 = vld [vmem:[%s485 + $0x8] sm:$0xff]
        %v810 = vpack.c.bf16 %v809, %v808
        %v811 = vld [vmem:[%s3] sm:$0x3]
        %v812 = vld [vmem:[%s4] sm:$0x1]
        %v814 = vlaneseq
        %v815 = vshrl.u32 %v814, 7
        %v816 = vsub.s32 0, %v815
        %v817 = vrot.slane %v812, %v816
        %v820 = vsel %vm555, %v810, 0
        %v823 = vsel %vm580, %v811, 0
        %825 = vmatprep.subr.bf16.mxu0 0
        %826 = vmatpush1.bf16.msra.mxu0 0
        %827 = vmatprep.subr.bf16.mxu0 0
        %828 = vmatpush1.bf16.msra.mxu0 0
        %829 = vmatprep.subr.bf16.mxu0 0
        %830 = vmatpush1.bf16.msra.mxu0 0
        %831 = vmatprep.subr.bf16.mxu0 0
        %832 = vmatpush1.bf16.msra.mxu0 0
        %833 = vmatprep.subr.bf16.mxu0 0
        %834 = vmatpush1.bf16.msra.mxu0 0
        %835 = vmatprep.subr.bf16.mxu0 0
        %836 = vmatpush1.bf16.msra.mxu0 0
        %837 = vmatprep.subr.bf16.mxu0 0
        %838 = vmatpush1.bf16.msra.mxu0 0
        %839 = vmatprep.subr.bf16.mxu0 0
        %840 = vmatpush1.bf16.msra.mxu0 %v823
        %841 = vmatprep.subr.bf16.mxu0 0
        %842 = vmatpush2.bf16.msra.mxu0 0
        %843 = vmatprep.subr.bf16.mxu0 0
        %844 = vmatpush2.bf16.msra.mxu0 0
        %845 = vmatprep.subr.bf16.mxu0 0
        %846 = vmatpush2.bf16.msra.mxu0 0
        %847 = vmatprep.subr.bf16.mxu0 0
        %848 = vmatpush2.bf16.msra.mxu0 0
        %849 = vmatprep.subr.bf16.mxu0 0
        %850 = vmatpush2.bf16.msra.mxu0 0
        %851 = vmatprep.subr.bf16.mxu0 0
        %852 = vmatpush2.bf16.msra.mxu0 0
        %853 = vmatprep.subr.bf16.mxu0 0
        %854 = vmatpush2.bf16.msra.mxu0 0
        %855 = vmatprep.subr.bf16.mxu0 0
        %856 = vmatpush2.bf16.msra.mxu0 0
        %857 = vmatprep.mubr.bf16.mxu0 0
        %858 = vmatmul.mubr.bf16.gmra.mxu0 %v820
        %v859 = vpop.f32.mrf.mxu0
        %v860 = vadd.f32 %v817, %v859
        %v861 = vpop.f32.mrf.mxu0
        %v862 = vpop.f32.mrf.mxu0
        %v863 = vadd.f32 %v817, %v862
        %v864 = vpop.f32.mrf.mxu0
        %865 = vdwg.mxu0
        %v866 = vmax.f32 %v860, 0.0
        %v867 = vmax.f32 %v863, 0.0
        %v868 = vmin.f32 %v866, 6.0
        %v869 = vmin.f32 %v867, 6.0
        %s870 = scalar_lea.vmem [#allocation2], 288
        %871 = vst.msk [vmem:[%s870 + $0x8] sm:$0xff] %vm502, %v868
        %872 = vst.msk [vmem:[%s870 + $0x10] sm:$0xff] %vm502, %v869
      $region68: #{tpu_custom_call.1} parent=55 // pred_fallthru
        _
      %p873 = scmp.eq.s32.totalorder %s25, 1
      // Predicated region
      $region69: #{tpu_custom_call.1} parent=55 // pred_check
        %p874 = pneg %p873
      $region70: #{tpu_custom_call.1} parent=55 // pred_check_branch
        %876 = sbr.rel (%p874) target = $region72
      $region71: #{tpu_custom_call.1} parent=55 // pred_region
        %s877 = scalar_lea.vmem [#allocation2], 288
        %878 = vst.msk [vmem:[%s877 + $0x8] sm:$0xff] %vm502, 0.0
        %879 = vst.msk [vmem:[%s877 + $0x10] sm:$0xff] %vm502, 0.0
      $region72: #{tpu_custom_call.1} parent=55 // pred_fallthru
        _
      %v880 = vld [vmem:[%s5] sm:$0x7]
      %v881 = vld [vmem:[%s5 + $0x4] sm:$0x7]
      %v882 = vld [vmem:[%s5 + $0x8] sm:$0x7]
      %v883 = vld [vmem:[#allocation2 + $0x7] sm:$0xff]
      %v884 = vld [vmem:[#allocation2 + $0xf] sm:$0xff]
      %v885 = vld [vmem:[#allocation2 + $0x27] sm:$0xff]
      %v886 = vld [vmem:[#allocation2 + $0x2f] sm:$0xff]
      %v887 = vld [vmem:[#allocation2 + $0x47] sm:$0xff]
      %v888 = vld [vmem:[#allocation2 + $0x4f] sm:$0xff]
      %v889 = vld [vmem:[#allocation2 + $0x67] sm:$0xff]
      %v890 = vld [vmem:[#allocation2 + $0x6f] sm:$0xff]
      %v891 = vld [vmem:[#allocation2 + $0x87] sm:$0xff]
      %v892 = vld [vmem:[#allocation2 + $0x8f] sm:$0xff]
      %v893 = vld [vmem:[#allocation2 + $0xa7] sm:$0xff]
      %v894 = vld [vmem:[#allocation2 + $0xaf] sm:$0xff]
      %v895 = vld [vmem:[#allocation2 + $0xc7] sm:$0xff]
      %v896 = vld [vmem:[#allocation2 + $0xcf] sm:$0xff]
      %v897 = vld [vmem:[#allocation2 + $0xe7] sm:$0xff]
      %v898 = vld [vmem:[#allocation2 + $0xef] sm:$0xff]
      %v899 = vld [vmem:[#allocation2 + $0x107] sm:$0xff]
      %v900 = vld [vmem:[#allocation2 + $0x10f] sm:$0xff]
      %v901 = vld [vmem:[#allocation2 + $0x127] sm:$0xff]
      %v902 = vld [vmem:[#allocation2 + $0x12f] sm:$0xff]
      %v903 = vld [vmem:[#allocation2 + $0x8] sm:$0xff]
      %v904 = vld [vmem:[#allocation2 + $0x10] sm:$0xff]
      %v905 = vld [vmem:[#allocation2 + $0x28] sm:$0xff]
      %v906 = vld [vmem:[#allocation2 + $0x30] sm:$0xff]
      %v907 = vld [vmem:[#allocation2 + $0x48] sm:$0xff]
      %v908 = vld [vmem:[#allocation2 + $0x50] sm:$0xff]
      %v909 = vld [vmem:[#allocation2 + $0x68] sm:$0xff]
      %v910 = vld [vmem:[#allocation2 + $0x70] sm:$0xff]
      %v911 = vld [vmem:[#allocation2 + $0x88] sm:$0xff]
      %v912 = vld [vmem:[#allocation2 + $0x90] sm:$0xff]
      %v913 = vld [vmem:[#allocation2 + $0xa8] sm:$0xff]
      %v914 = vld [vmem:[#allocation2 + $0xb0] sm:$0xff]
      %v915 = vld [vmem:[#allocation2 + $0xc8] sm:$0xff]
      %v916 = vld [vmem:[#allocation2 + $0xd0] sm:$0xff]
      %v917 = vld [vmem:[#allocation2 + $0xe8] sm:$0xff]
      %v918 = vld [vmem:[#allocation2 + $0xf0] sm:$0xff]
      %v919 = vld [vmem:[#allocation2 + $0x108] sm:$0xff]
      %v920 = vld [vmem:[#allocation2 + $0x110] sm:$0xff]
      %v921 = vld [vmem:[#allocation2 + $0x128] sm:$0xff]
      %v922 = vld [vmem:[#allocation2 + $0x130] sm:$0xff]
      %v923 = vld [vmem:[#allocation2 + $0x9] sm:$0xff]
      %v924 = vld [vmem:[#allocation2 + $0x11] sm:$0xff]
      %v925 = vld [vmem:[#allocation2 + $0x29] sm:$0xff]
      %v926 = vld [vmem:[#allocation2 + $0x31] sm:$0xff]
      %v927 = vld [vmem:[#allocation2 + $0x49] sm:$0xff]
      %v928 = vld [vmem:[#allocation2 + $0x51] sm:$0xff]
      %v929 = vld [vmem:[#allocation2 + $0x69] sm:$0xff]
      %v930 = vld [vmem:[#allocation2 + $0x71] sm:$0xff]
      %v931 = vld [vmem:[#allocation2 + $0x89] sm:$0xff]
      %v932 = vld [vmem:[#allocation2 + $0x91] sm:$0xff]
      %v933 = vld [vmem:[#allocation2 + $0xa9] sm:$0xff]
      %v934 = vld [vmem:[#allocation2 + $0xb1] sm:$0xff]
      %v935 = vld [vmem:[#allocation2 + $0xc9] sm:$0xff]
      %v936 = vld [vmem:[#allocation2 + $0xd1] sm:$0xff]
      %v937 = vld [vmem:[#allocation2 + $0xe9] sm:$0xff]
      %v938 = vld [vmem:[#allocation2 + $0xf1] sm:$0xff]
      %v939 = vld [vmem:[#allocation2 + $0x109] sm:$0xff]
      %v940 = vld [vmem:[#allocation2 + $0x111] sm:$0xff]
      %v941 = vld [vmem:[#allocation2 + $0x129] sm:$0xff]
      %v942 = vld [vmem:[#allocation2 + $0x131] sm:$0xff]
      %v943 = vlaneseq
      %v944 = vshrl.u32 %v943, 7
      %v945 = vsub.s32 0, %v944
      %v946 = vrot.slane %v880, %v945
      %v947 = vmul.f32 %v883, %v946
      %v948 = vmul.f32 %v884, %v946
      %v949 = vmul.f32 %v885, %v946
      %v950 = vmul.f32 %v886, %v946
      %v951 = vmul.f32 %v887, %v946
      %v952 = vmul.f32 %v888, %v946
      %v953 = vmul.f32 %v889, %v946
      %v954 = vmul.f32 %v890, %v946
      %v955 = vmul.f32 %v891, %v946
      %v956 = vmul.f32 %v892, %v946
      %v957 = vmul.f32 %v893, %v946
      %v958 = vmul.f32 %v894, %v946
      %v959 = vmul.f32 %v895, %v946
      %v960 = vmul.f32 %v896, %v946
      %v961 = vmul.f32 %v897, %v946
      %v962 = vmul.f32 %v898, %v946
      %v963 = vadd.f32 %v947, 0.0
      %v964 = vadd.f32 %v948, 0.0
      %v965 = vadd.f32 %v949, 0.0
      %v966 = vadd.f32 %v950, 0.0
      %v967 = vadd.f32 %v951, 0.0
      %v968 = vadd.f32 %v952, 0.0
      %v969 = vadd.f32 %v953, 0.0
      %v970 = vadd.f32 %v954, 0.0
      %v971 = vadd.f32 %v955, 0.0
      %v972 = vadd.f32 %v956, 0.0
      %v973 = vadd.f32 %v957, 0.0
      %v974 = vadd.f32 %v958, 0.0
      %v975 = vadd.f32 %v959, 0.0
      %v976 = vadd.f32 %v960, 0.0
      %v977 = vadd.f32 %v961, 0.0
      %v978 = vadd.f32 %v962, 0.0
      %v979 = vlaneseq
      %v980 = vshrl.u32 %v979, 7
      %v981 = vsub.s32 1, %v980
      %v982 = vrot.slane %v880, %v981
      %v983 = vmul.f32 %v903, %v982
      %v984 = vmul.f32 %v904, %v982
      %v985 = vmul.f32 %v905, %v982
      %v986 = vmul.f32 %v906, %v982
      %v987 = vmul.f32 %v907, %v982
      %v988 = vmul.f32 %v908, %v982
      %v989 = vmul.f32 %v909, %v982
      %v990 = vmul.f32 %v910, %v982
      %v991 = vmul.f32 %v911, %v982
      %v992 = vmul.f32 %v912, %v982
      %v993 = vmul.f32 %v913, %v982
      %v994 = vmul.f32 %v914, %v982
      %v995 = vmul.f32 %v915, %v982
      %v996 = vmul.f32 %v916, %v982
      %v997 = vmul.f32 %v917, %v982
      %v998 = vmul.f32 %v918, %v982
      %v999 = vadd.f32 %v963, %v983
      %v1000 = vadd.f32 %v964, %v984
      %v1001 = vadd.f32 %v965, %v985
      %v1002 = vadd.f32 %v966, %v986
      %v1003 = vadd.f32 %v967, %v987
      %v1004 = vadd.f32 %v968, %v988
      %v1005 = vadd.f32 %v969, %v989
      %v1006 = vadd.f32 %v970, %v990
      %v1007 = vadd.f32 %v971, %v991
      %v1008 = vadd.f32 %v972, %v992
      %v1009 = vadd.f32 %v973, %v993
      %v1010 = vadd.f32 %v974, %v994
      %v1011 = vadd.f32 %v975, %v995
      %v1012 = vadd.f32 %v976, %v996
      %v1013 = vadd.f32 %v977, %v997
      %v1014 = vadd.f32 %v978, %v998
      %v1015 = vlaneseq
      %v1016 = vshrl.u32 %v1015, 7
      %v1017 = vsub.s32 2, %v1016
      %v1018 = vrot.slane %v880, %v1017
      %v1019 = vmul.f32 %v923, %v1018
      %v1020 = vmul.f32 %v924, %v1018
      %v1021 = vmul.f32 %v925, %v1018
      %v1022 = vmul.f32 %v926, %v1018
      %v1023 = vmul.f32 %v927, %v1018
      %v1024 = vmul.f32 %v928, %v1018
      %v1025 = vmul.f32 %v929, %v1018
      %v1026 = vmul.f32 %v930, %v1018
      %v1027 = vmul.f32 %v931, %v1018
      %v1028 = vmul.f32 %v932, %v1018
      %v1029 = vmul.f32 %v933, %v1018
      %v1030 = vmul.f32 %v934, %v1018
      %v1031 = vmul.f32 %v935, %v1018
      %v1032 = vmul.f32 %v936, %v1018
      %v1033 = vmul.f32 %v937, %v1018
      %v1034 = vmul.f32 %v938, %v1018
      %v1035 = vadd.f32 %v999, %v1019
      %v1036 = vadd.f32 %v1000, %v1020
      %v1037 = vadd.f32 %v1001, %v1021
      %v1038 = vadd.f32 %v1002, %v1022
      %v1039 = vadd.f32 %v1003, %v1023
      %v1040 = vadd.f32 %v1004, %v1024
      %v1041 = vadd.f32 %v1005, %v1025
      %v1042 = vadd.f32 %v1006, %v1026
      %v1043 = vadd.f32 %v1007, %v1027
      %v1044 = vadd.f32 %v1008, %v1028
      %v1045 = vadd.f32 %v1009, %v1029
      %v1046 = vadd.f32 %v1010, %v1030
      %v1047 = vadd.f32 %v1011, %v1031
      %v1048 = vadd.f32 %v1012, %v1032
      %v1049 = vadd.f32 %v1013, %v1033
      %v1050 = vadd.f32 %v1014, %v1034
      %v1051 = vlaneseq
      %v1052 = vshrl.u32 %v1051, 7
      %v1053 = vsub.s32 0, %v1052
      %v1054 = vrot.slane %v881, %v1053
      %v1055 = vmul.f32 %v885, %v1054
      %v1056 = vmul.f32 %v886, %v1054
      %v1057 = vmul.f32 %v887, %v1054
      %v1058 = vmul.f32 %v888, %v1054
      %v1059 = vmul.f32 %v889, %v1054
      %v1060 = vmul.f32 %v890, %v1054
      %v1061 = vmul.f32 %v891, %v1054
      %v1062 = vmul.f32 %v892, %v1054
      %v1063 = vmul.f32 %v893, %v1054
      %v1064 = vmul.f32 %v894, %v1054
      %v1065 = vmul.f32 %v895, %v1054
      %v1066 = vmul.f32 %v896, %v1054
      %v1067 = vmul.f32 %v897, %v1054
      %v1068 = vmul.f32 %v898, %v1054
      %v1069 = vmul.f32 %v899, %v1054
      %v1070 = vmul.f32 %v900, %v1054
      %v1071 = vadd.f32 %v1035, %v1055
      %v1072 = vadd.f32 %v1036, %v1056
      %v1073 = vadd.f32 %v1037, %v1057
      %v1074 = vadd.f32 %v1038, %v1058
      %v1075 = vadd.f32 %v1039, %v1059
      %v1076 = vadd.f32 %v1040, %v1060
      %v1077 = vadd.f32 %v1041, %v1061
      %v1078 = vadd.f32 %v1042, %v1062
      %v1079 = vadd.f32 %v1043, %v1063
      %v1080 = vadd.f32 %v1044, %v1064
      %v1081 = vadd.f32 %v1045, %v1065
      %v1082 = vadd.f32 %v1046, %v1066
      %v1083 = vadd.f32 %v1047, %v1067
      %v1084 = vadd.f32 %v1048, %v1068
      %v1085 = vadd.f32 %v1049, %v1069
      %v1086 = vadd.f32 %v1050, %v1070
      %v1087 = vlaneseq
      %v1088 = vshrl.u32 %v1087, 7
      %v1089 = vsub.s32 1, %v1088
      %v1090 = vrot.slane %v881, %v1089
      %v1091 = vmul.f32 %v905, %v1090
      %v1092 = vmul.f32 %v906, %v1090
      %v1093 = vmul.f32 %v907, %v1090
      %v1094 = vmul.f32 %v908, %v1090
      %v1095 = vmul.f32 %v909, %v1090
      %v1096 = vmul.f32 %v910, %v1090
      %v1097 = vmul.f32 %v911, %v1090
      %v1098 = vmul.f32 %v912, %v1090
      %v1099 = vmul.f32 %v913, %v1090
      %v1100 = vmul.f32 %v914, %v1090
      %v1101 = vmul.f32 %v915, %v1090
      %v1102 = vmul.f32 %v916, %v1090
      %v1103 = vmul.f32 %v917, %v1090
      %v1104 = vmul.f32 %v918, %v1090
      %v1105 = vmul.f32 %v919, %v1090
      %v1106 = vmul.f32 %v920, %v1090
      %v1107 = vadd.f32 %v1071, %v1091
      %v1108 = vadd.f32 %v1072, %v1092
      %v1109 = vadd.f32 %v1073, %v1093
      %v1110 = vadd.f32 %v1074, %v1094
      %v1111 = vadd.f32 %v1075, %v1095
      %v1112 = vadd.f32 %v1076, %v1096
      %v1113 = vadd.f32 %v1077, %v1097
      %v1114 = vadd.f32 %v1078, %v1098
      %v1115 = vadd.f32 %v1079, %v1099
      %v1116 = vadd.f32 %v1080, %v1100
      %v1117 = vadd.f32 %v1081, %v1101
      %v1118 = vadd.f32 %v1082, %v1102
      %v1119 = vadd.f32 %v1083, %v1103
      %v1120 = vadd.f32 %v1084, %v1104
      %v1121 = vadd.f32 %v1085, %v1105
      %v1122 = vadd.f32 %v1086, %v1106
      %v1123 = vlaneseq
      %v1124 = vshrl.u32 %v1123, 7
      %v1125 = vsub.s32 2, %v1124
      %v1126 = vrot.slane %v881, %v1125
      %v1127 = vmul.f32 %v925, %v1126
      %v1128 = vmul.f32 %v926, %v1126
      %v1129 = vmul.f32 %v927, %v1126
      %v1130 = vmul.f32 %v928, %v1126
      %v1131 = vmul.f32 %v929, %v1126
      %v1132 = vmul.f32 %v930, %v1126
      %v1133 = vmul.f32 %v931, %v1126
      %v1134 = vmul.f32 %v932, %v1126
      %v1135 = vmul.f32 %v933, %v1126
      %v1136 = vmul.f32 %v934, %v1126
      %v1137 = vmul.f32 %v935, %v1126
      %v1138 = vmul.f32 %v936, %v1126
      %v1139 = vmul.f32 %v937, %v1126
      %v1140 = vmul.f32 %v938, %v1126
      %v1141 = vmul.f32 %v939, %v1126
      %v1142 = vmul.f32 %v940, %v1126
      %v1143 = vadd.f32 %v1107, %v1127
      %v1144 = vadd.f32 %v1108, %v1128
      %v1145 = vadd.f32 %v1109, %v1129
      %v1146 = vadd.f32 %v1110, %v1130
      %v1147 = vadd.f32 %v1111, %v1131
      %v1148 = vadd.f32 %v1112, %v1132
      %v1149 = vadd.f32 %v1113, %v1133
      %v1150 = vadd.f32 %v1114, %v1134
      %v1151 = vadd.f32 %v1115, %v1135
      %v1152 = vadd.f32 %v1116, %v1136
      %v1153 = vadd.f32 %v1117, %v1137
      %v1154 = vadd.f32 %v1118, %v1138
      %v1155 = vadd.f32 %v1119, %v1139
      %v1156 = vadd.f32 %v1120, %v1140
      %v1157 = vadd.f32 %v1121, %v1141
      %v1158 = vadd.f32 %v1122, %v1142
      %v1159 = vlaneseq
      %v1160 = vshrl.u32 %v1159, 7
      %v1161 = vsub.s32 0, %v1160
      %v1162 = vrot.slane %v882, %v1161
      %v1163 = vmul.f32 %v887, %v1162
      %v1164 = vmul.f32 %v888, %v1162
      %v1165 = vmul.f32 %v889, %v1162
      %v1166 = vmul.f32 %v890, %v1162
      %v1167 = vmul.f32 %v891, %v1162
      %v1168 = vmul.f32 %v892, %v1162
      %v1169 = vmul.f32 %v893, %v1162
      %v1170 = vmul.f32 %v894, %v1162
      %v1171 = vmul.f32 %v895, %v1162
      %v1172 = vmul.f32 %v896, %v1162
      %v1173 = vmul.f32 %v897, %v1162
      %v1174 = vmul.f32 %v898, %v1162
      %v1175 = vmul.f32 %v899, %v1162
      %v1176 = vmul.f32 %v900, %v1162
      %v1177 = vmul.f32 %v901, %v1162
      %v1178 = vmul.f32 %v902, %v1162
      %v1179 = vadd.f32 %v1143, %v1163
      %v1180 = vadd.f32 %v1144, %v1164
      %v1181 = vadd.f32 %v1145, %v1165
      %v1182 = vadd.f32 %v1146, %v1166
      %v1183 = vadd.f32 %v1147, %v1167
      %v1184 = vadd.f32 %v1148, %v1168
      %v1185 = vadd.f32 %v1149, %v1169
      %v1186 = vadd.f32 %v1150, %v1170
      %v1187 = vadd.f32 %v1151, %v1171
      %v1188 = vadd.f32 %v1152, %v1172
      %v1189 = vadd.f32 %v1153, %v1173
      %v1190 = vadd.f32 %v1154, %v1174
      %v1191 = vadd.f32 %v1155, %v1175
      %v1192 = vadd.f32 %v1156, %v1176
      %v1193 = vadd.f32 %v1157, %v1177
      %v1194 = vadd.f32 %v1158, %v1178
      %v1195 = vlaneseq
      %v1196 = vshrl.u32 %v1195, 7
      %v1197 = vsub.s32 1, %v1196
      %v1198 = vrot.slane %v882, %v1197
      %v1199 = vmul.f32 %v907, %v1198
      %v1200 = vmul.f32 %v908, %v1198
      %v1201 = vmul.f32 %v909, %v1198
      %v1202 = vmul.f32 %v910, %v1198
      %v1203 = vmul.f32 %v911, %v1198
      %v1204 = vmul.f32 %v912, %v1198
      %v1205 = vmul.f32 %v913, %v1198
      %v1206 = vmul.f32 %v914, %v1198
      %v1207 = vmul.f32 %v915, %v1198
      %v1208 = vmul.f32 %v916, %v1198
      %v1209 = vmul.f32 %v917, %v1198
      %v1210 = vmul.f32 %v918, %v1198
      %v1211 = vmul.f32 %v919, %v1198
      %v1212 = vmul.f32 %v920, %v1198
      %v1213 = vmul.f32 %v921, %v1198
      %v1214 = vmul.f32 %v922, %v1198
      %v1215 = vadd.f32 %v1179, %v1199
      %v1216 = vadd.f32 %v1180, %v1200
      %v1217 = vadd.f32 %v1181, %v1201
      %v1218 = vadd.f32 %v1182, %v1202
      %v1219 = vadd.f32 %v1183, %v1203
      %v1220 = vadd.f32 %v1184, %v1204
      %v1221 = vadd.f32 %v1185, %v1205
      %v1222 = vadd.f32 %v1186, %v1206
      %v1223 = vadd.f32 %v1187, %v1207
      %v1224 = vadd.f32 %v1188, %v1208
      %v1225 = vadd.f32 %v1189, %v1209
      %v1226 = vadd.f32 %v1190, %v1210
      %v1227 = vadd.f32 %v1191, %v1211
      %v1228 = vadd.f32 %v1192, %v1212
      %v1229 = vadd.f32 %v1193, %v1213
      %v1230 = vadd.f32 %v1194, %v1214
      %v1231 = vlaneseq
      %v1232 = vshrl.u32 %v1231, 7
      %v1233 = vsub.s32 2, %v1232
      %v1234 = vrot.slane %v882, %v1233
      %v1235 = vmul.f32 %v927, %v1234
      %v1236 = vmul.f32 %v928, %v1234
      %v1237 = vmul.f32 %v929, %v1234
      %v1238 = vmul.f32 %v930, %v1234
      %v1239 = vmul.f32 %v931, %v1234
      %v1240 = vmul.f32 %v932, %v1234
      %v1241 = vmul.f32 %v933, %v1234
      %v1242 = vmul.f32 %v934, %v1234
      %v1243 = vmul.f32 %v935, %v1234
      %v1244 = vmul.f32 %v936, %v1234
      %v1245 = vmul.f32 %v937, %v1234
      %v1246 = vmul.f32 %v938, %v1234
      %v1247 = vmul.f32 %v939, %v1234
      %v1248 = vmul.f32 %v940, %v1234
      %v1249 = vmul.f32 %v941, %v1234
      %v1250 = vmul.f32 %v942, %v1234
      %v1251 = vadd.f32 %v1215, %v1235
      %v1252 = vadd.f32 %v1216, %v1236
      %v1253 = vadd.f32 %v1217, %v1237
      %v1254 = vadd.f32 %v1218, %v1238
      %v1255 = vadd.f32 %v1219, %v1239
      %v1256 = vadd.f32 %v1220, %v1240
      %v1257 = vadd.f32 %v1221, %v1241
      %v1258 = vadd.f32 %v1222, %v1242
      %v1259 = vadd.f32 %v1223, %v1243
      %v1260 = vadd.f32 %v1224, %v1244
      %v1261 = vadd.f32 %v1225, %v1245
      %v1262 = vadd.f32 %v1226, %v1246
      %v1263 = vadd.f32 %v1227, %v1247
      %v1264 = vadd.f32 %v1228, %v1248
      %v1265 = vadd.f32 %v1229, %v1249
      %v1266 = vadd.f32 %v1230, %v1250
      %v1267 = vld [vmem:[%s6] sm:$0x1]
      %v1269 = vlaneseq
      %v1270 = vshrl.u32 %v1269, 7
      %v1271 = vsub.s32 0, %v1270
      %v1272 = vrot.slane %v1267, %v1271
      %v1274 = vadd.f32 %v1251, %v1272
      %v1275 = vadd.f32 %v1252, %v1272
      %v1276 = vadd.f32 %v1253, %v1272
      %v1277 = vadd.f32 %v1254, %v1272
      %v1278 = vadd.f32 %v1255, %v1272
      %v1279 = vadd.f32 %v1256, %v1272
      %v1280 = vadd.f32 %v1257, %v1272
      %v1281 = vadd.f32 %v1258, %v1272
      %v1282 = vadd.f32 %v1259, %v1272
      %v1283 = vadd.f32 %v1260, %v1272
      %v1284 = vadd.f32 %v1261, %v1272
      %v1285 = vadd.f32 %v1262, %v1272
      %v1286 = vadd.f32 %v1263, %v1272
      %v1287 = vadd.f32 %v1264, %v1272
      %v1288 = vadd.f32 %v1265, %v1272
      %v1289 = vadd.f32 %v1266, %v1272
      %v1290 = vmax.f32 %v1274, 0.0
      %v1291 = vmax.f32 %v1275, 0.0
      %v1292 = vmax.f32 %v1276, 0.0
      %v1293 = vmax.f32 %v1277, 0.0
      %v1294 = vmax.f32 %v1278, 0.0
      %v1295 = vmax.f32 %v1279, 0.0
      %v1296 = vmax.f32 %v1280, 0.0
      %v1297 = vmax.f32 %v1281, 0.0
      %v1298 = vmax.f32 %v1282, 0.0
      %v1299 = vmax.f32 %v1283, 0.0
      %v1300 = vmax.f32 %v1284, 0.0
      %v1301 = vmax.f32 %v1285, 0.0
      %v1302 = vmax.f32 %v1286, 0.0
      %v1303 = vmax.f32 %v1287, 0.0
      %v1304 = vmax.f32 %v1288, 0.0
      %v1305 = vmax.f32 %v1289, 0.0
      %v1306 = vmin.f32 %v1290, 6.0
      %v1307 = vmin.f32 %v1291, 6.0
      %v1308 = vmin.f32 %v1292, 6.0
      %v1309 = vmin.f32 %v1293, 6.0
      %v1310 = vmin.f32 %v1294, 6.0
      %v1311 = vmin.f32 %v1295, 6.0
      %v1312 = vmin.f32 %v1296, 6.0
      %v1313 = vmin.f32 %v1297, 6.0
      %v1314 = vmin.f32 %v1298, 6.0
      %v1315 = vmin.f32 %v1299, 6.0
      %v1316 = vmin.f32 %v1300, 6.0
      %v1317 = vmin.f32 %v1301, 6.0
      %v1318 = vmin.f32 %v1302, 6.0
      %v1319 = vmin.f32 %v1303, 6.0
      %v1320 = vmin.f32 %v1304, 6.0
      %v1321 = vmin.f32 %v1305, 6.0
      %v1322 = vpack.c.bf16 %v1307, %v1306
      %v1323 = vpack.c.bf16 %v1309, %v1308
      %v1324 = vpack.c.bf16 %v1311, %v1310
      %v1325 = vpack.c.bf16 %v1313, %v1312
      %v1326 = vpack.c.bf16 %v1315, %v1314
      %v1327 = vpack.c.bf16 %v1317, %v1316
      %v1328 = vpack.c.bf16 %v1319, %v1318
      %v1329 = vpack.c.bf16 %v1321, %v1320
      %v1330 = vld [vmem:[%s7] sm:$0xf]
      %v1331 = vld [vmem:[%s7 + $0x4] sm:$0xf]
      %v1332 = vld [vmem:[%s7 + $0x8] sm:$0xf]
      %v1333 = vld [vmem:[%s8] sm:$0x1]
      %v1335 = vlaneseq
      %v1336 = vshrl.u32 %v1335, 7
      %v1337 = vsub.s32 0, %v1336
      %v1338 = vrot.slane %v1333, %v1337
      %v1343 = vunpack.c.l.b16 %v1330
      %v1344 = vunpack.c.l.b16 %v1331
      %v1345 = vunpack.c.l.b16 %v1332
      %v1346 = vpack.c.b16 %v1344, %v1343
      %v1347 = vpack.c.b16 %v1345, %v1345
      %v1350 = vsel %vm502, %v1322, 0
      %v1353 = vsel %vm502, %v1323, 0
      %v1356 = vsel %vm502, %v1324, 0
      %v1359 = vsel %vm502, %v1325, 0
      %v1362 = vsel %vm502, %v1326, 0
      %v1365 = vsel %vm502, %v1327, 0
      %v1368 = vsel %vm502, %v1328, 0
      %v1371 = vsel %vm502, %v1329, 0
      %vm1373 = vcmask 1043456
      %v1375 = vsel %vm1373, %v1347, 0
      %1377 = vmatprep.subr.bf16.mxu0 0
      %1378 = vmatpush1.bf16.msra.mxu0 0
      %1379 = vmatprep.subr.bf16.mxu0 0
      %1380 = vmatpush1.bf16.msra.mxu0 0
      %1381 = vmatprep.subr.bf16.mxu0 0
      %1382 = vmatpush1.bf16.msra.mxu0 0
      %1383 = vmatprep.subr.bf16.mxu0 0
      %1384 = vmatpush1.bf16.msra.mxu0 0
      %1385 = vmatprep.subr.bf16.mxu0 0
      %1386 = vmatpush1.bf16.msra.mxu0 0
      %1387 = vmatprep.subr.bf16.mxu0 0
      %1388 = vmatpush1.bf16.msra.mxu0 0
      %1389 = vmatprep.subr.bf16.mxu0 0
      %1390 = vmatpush1.bf16.msra.mxu0 %v1375
      %1391 = vmatprep.subr.bf16.mxu0 0
      %1392 = vmatpush1.bf16.msra.mxu0 %v1346
      %1393 = vmatprep.subr.bf16.mxu0 0
      %1394 = vmatpush2.bf16.msra.mxu0 0
      %1395 = vmatprep.subr.bf16.mxu0 0
      %1396 = vmatpush2.bf16.msra.mxu0 0
      %1397 = vmatprep.subr.bf16.mxu0 0
      %1398 = vmatpush2.bf16.msra.mxu0 0
      %1399 = vmatprep.subr.bf16.mxu0 0
      %1400 = vmatpush2.bf16.msra.mxu0 0
      %1401 = vmatprep.subr.bf16.mxu0 0
      %1402 = vmatpush2.bf16.msra.mxu0 0
      %1403 = vmatprep.subr.bf16.mxu0 0
      %1404 = vmatpush2.bf16.msra.mxu0 0
      %1405 = vmatprep.subr.bf16.mxu0 0
      %1406 = vmatpush2.bf16.msra.mxu0 0
      %1407 = vmatprep.subr.bf16.mxu0 0
      %1408 = vmatpush2.bf16.msra.mxu0 0
      %1409 = vmatprep.mubr.bf16.mxu0 0
      %1410 = vmatmul.mubr.bf16.gmra.mxu0 %v1350
      %v1411 = vpop.f32.mrf.mxu0
      %v1412 = vadd.f32 %v1338, %v1411
      %v1413 = vpop.f32.mrf.mxu0
      %v1414 = vpop.f32.mrf.mxu0
      %v1415 = vadd.f32 %v1338, %v1414
      %v1416 = vpop.f32.mrf.mxu0
      %1417 = vmatprep.mubr.bf16.mxu0 0
      %1418 = vmatmul.mubr.bf16.gmra.mxu0 %v1353
      %v1419 = vpop.f32.mrf.mxu0
      %v1420 = vadd.f32 %v1338, %v1419
      %v1421 = vpop.f32.mrf.mxu0
      %v1422 = vpop.f32.mrf.mxu0
      %v1423 = vadd.f32 %v1338, %v1422
      %v1424 = vpop.f32.mrf.mxu0
      %1425 = vmatprep.mubr.bf16.mxu0 0
      %1426 = vmatmul.mubr.bf16.gmra.mxu0 %v1356
      %v1427 = vpop.f32.mrf.mxu0
      %v1428 = vadd.f32 %v1338, %v1427
      %v1429 = vpop.f32.mrf.mxu0
      %v1430 = vpop.f32.mrf.mxu0
      %v1431 = vadd.f32 %v1338, %v1430
      %v1432 = vpop.f32.mrf.mxu0
      %1433 = vmatprep.mubr.bf16.mxu0 0
      %1434 = vmatmul.mubr.bf16.gmra.mxu0 %v1359
      %v1435 = vpop.f32.mrf.mxu0
      %v1436 = vadd.f32 %v1338, %v1435
      %v1437 = vpop.f32.mrf.mxu0
      %v1438 = vpop.f32.mrf.mxu0
      %v1439 = vadd.f32 %v1338, %v1438
      %v1440 = vpop.f32.mrf.mxu0
      %1441 = vmatprep.mubr.bf16.mxu0 0
      %1442 = vmatmul.mubr.bf16.gmra.mxu0 %v1362
      %v1443 = vpop.f32.mrf.mxu0
      %v1444 = vadd.f32 %v1338, %v1443
      %v1445 = vpop.f32.mrf.mxu0
      %v1446 = vpop.f32.mrf.mxu0
      %v1447 = vadd.f32 %v1338, %v1446
      %v1448 = vpop.f32.mrf.mxu0
      %1449 = vmatprep.mubr.bf16.mxu0 0
      %1450 = vmatmul.mubr.bf16.gmra.mxu0 %v1365
      %v1451 = vpop.f32.mrf.mxu0
      %v1452 = vadd.f32 %v1338, %v1451
      %v1453 = vpop.f32.mrf.mxu0
      %v1454 = vpop.f32.mrf.mxu0
      %v1455 = vadd.f32 %v1338, %v1454
      %v1456 = vpop.f32.mrf.mxu0
      %1457 = vmatprep.mubr.bf16.mxu0 0
      %1458 = vmatmul.mubr.bf16.gmra.mxu0 %v1368
      %v1459 = vpop.f32.mrf.mxu0
      %v1460 = vadd.f32 %v1338, %v1459
      %v1461 = vpop.f32.mrf.mxu0
      %v1462 = vpop.f32.mrf.mxu0
      %v1463 = vadd.f32 %v1338, %v1462
      %v1464 = vpop.f32.mrf.mxu0
      %1465 = vmatprep.mubr.bf16.mxu0 0
      %1466 = vmatmul.mubr.bf16.gmra.mxu0 %v1371
      %v1467 = vpop.f32.mrf.mxu0
      %v1468 = vadd.f32 %v1338, %v1467
      %v1469 = vpop.f32.mrf.mxu0
      %v1470 = vpop.f32.mrf.mxu0
      %v1471 = vadd.f32 %v1338, %v1470
      %v1472 = vpop.f32.mrf.mxu0
      %1473 = vdwg.mxu0
      %v1474 = vadd.f32 %v1412, %v523
      %v1475 = vadd.f32 %v1415, %v524
      %v1476 = vadd.f32 %v1420, %v525
      %v1477 = vadd.f32 %v1423, %v526
      %v1478 = vadd.f32 %v1428, %v527
      %v1479 = vadd.f32 %v1431, %v528
      %v1480 = vadd.f32 %v1436, %v529
      %v1481 = vadd.f32 %v1439, %v530
      %v1482 = vadd.f32 %v1444, %v531
      %v1483 = vadd.f32 %v1447, %v532
      %v1484 = vadd.f32 %v1452, %v533
      %v1485 = vadd.f32 %v1455, %v534
      %v1486 = vadd.f32 %v1460, %v535
      %v1487 = vadd.f32 %v1463, %v536
      %v1488 = vadd.f32 %v1468, %v537
      %v1489 = vadd.f32 %v1471, %v538
      %1490 = vst.msk [vmem:[%s499] sm:$0xff] %vm555, %v1474
      %1491 = vst.msk [vmem:[%s499 + $0x8] sm:$0xff] %vm555, %v1475
      %1492 = vst.msk [vmem:[%s499 + $0x10] sm:$0xff] %vm555, %v1476
      %1493 = vst.msk [vmem:[%s499 + $0x18] sm:$0xff] %vm555, %v1477
      %1494 = vst.msk [vmem:[%s499 + $0x20] sm:$0xff] %vm555, %v1478
      %1495 = vst.msk [vmem:[%s499 + $0x28] sm:$0xff] %vm555, %v1479
      %1496 = vst.msk [vmem:[%s499 + $0x30] sm:$0xff] %vm555, %v1480
      %1497 = vst.msk [vmem:[%s499 + $0x38] sm:$0xff] %vm555, %v1481
      %1498 = vst.msk [vmem:[%s499 + $0x40] sm:$0xff] %vm555, %v1482
      %1499 = vst.msk [vmem:[%s499 + $0x48] sm:$0xff] %vm555, %v1483
      %1500 = vst.msk [vmem:[%s499 + $0x50] sm:$0xff] %vm555, %v1484
      %1501 = vst.msk [vmem:[%s499 + $0x58] sm:$0xff] %vm555, %v1485
      %1502 = vst.msk [vmem:[%s499 + $0x60] sm:$0xff] %vm555, %v1486
      %1503 = vst.msk [vmem:[%s499 + $0x68] sm:$0xff] %vm555, %v1487
      %1504 = vst.msk [vmem:[%s499 + $0x70] sm:$0xff] %vm555, %v1488
      %1505 = vst.msk [vmem:[%s499 + $0x78] sm:$0xff] %vm555, %v1489
      %s1506 = smul.u32 8, %s25
      %p1507 = scmp.lt.s32.totalorder %s24, 1
      %s1508 = scalar_select %p1507, %s24, 1
      %p1509 = scmp.lt.s32.totalorder %s1506, 15
      %s1510 = scalar_select %p1509, %s1506, 15
      %s1511 = smul.addr %s1510, 2
      %s1512 = smul.addr %s1508, 32
      %s1513 = sadd.s32 %s1511, %s1512
      %s1514 = smul.addr %s1513, 8
      %s1515 = scalar_lea.vmem %s9, %s1514
      // Predicated region
      $region73: #{tpu_custom_call.1} parent=55 // pred_check
        %p1516 = pneg %p278
      $region74: #{tpu_custom_call.1} parent=55 // pred_check_branch
        %1518 = sbr.rel (%p1516) target = $region76
      $region75: #{tpu_custom_call.1} parent=55 // pred_region
        %s1519 = smul.u32 8, %s25
      $region76: #{tpu_custom_call.1} parent=55 // pred_fallthru
        _
    $region56: #{tpu_custom_call.1} parent=5 // pred_fallthru
      _
    %p1520 = scmp.le.s32.totalorder 2, %s15
    // Predicated region
    $region77: #{tpu_custom_call.1} parent=5 // pred_check
      %p1521 = pneg %p1520
    $region78: #{tpu_custom_call.1} parent=5 // pred_check_branch
      %1523 = sbr.rel (%p1521) target = $region80
    $region79: #{tpu_custom_call.1} parent=5 // pred_region
      %s1524 = ssub.s32 %s15, 2
      // Predicated region
      $region81: #{tpu_custom_call.1} parent=79 // pred_check
        %p1525 = pneg %p284
      $region82: #{tpu_custom_call.1} parent=79 // pred_check_branch
        %1527 = sbr.rel (%p1525) target = $region84
      $region83: #{tpu_custom_call.1} parent=79 // pred_region
        %s1528 = smul.u32 8, %s27
        %p1529 = scmp.lt.s32.totalorder %s26, 1
        %s1530 = scalar_select %p1529, %s26, 1
        %p1531 = scmp.lt.s32.totalorder %s1528, 15
        %s1532 = scalar_select %p1531, %s1528, 15
        %s1533 = smul.addr %s1532, 2
        %s1534 = smul.addr %s1530, 32
        %s1535 = sadd.s32 %s1533, %s1534
        %s1536 = smul.addr %s1535, 8
        %s1537 = scalar_lea.vmem %s9, %s1536
      $region84: #{tpu_custom_call.1} parent=79 // pred_fallthru
        _
    $region80: #{tpu_custom_call.1} parent=5 // pred_fallthru
      _
  $region6: #{tpu_custom_call.1} parent=0 // loop_footer
    %s19 = sadd.s32 1, %s15
  $region7: #{tpu_custom_call.1} parent=0 // loop_footer_branch
    %14 = sbr.rel target = $region3
  $region8: #{tpu_custom_call.1} parent=0 // loop_exit
    _

</llo_original>
